<compile_context>
chip_gen: v7x
topology: tpu7x:2x2x1
jax: 0.10.0
libtpu: 0.0.40
codegen_flags: <defaults>
</compile_context>

<pallas_src>
import math
from functools import partial

import jax
import jax.numpy as jnp
from jax.experimental import pallas as pl
from jax.experimental.pallas import tpu as pltpu


def _layernorm_f32(x32, w, b, eps=1e-5):
    mu = jnp.mean(x32, axis=-1, keepdims=True)
    xc = x32 - mu
    var = jnp.mean(xc * xc, axis=-1, keepdims=True)
    return xc * jax.lax.rsqrt(var + eps) * w + b


def _quick_gelu(x):
    return x * jax.nn.sigmoid(1.702 * x)


def transformer_kernel(
    x_ref,                         # (Bt, S, D)   input (read only at l == 0)
    ln1_w_ref, ln1_b_ref,          # (1, 1, D)    f32
    w_qkv_ref, b_qkv_ref,          # (1, D, 3D) bf16, (1, 1, 3D) f32
    w_out_ref, b_out_ref,          # (1, D, D)  bf16, (1, 1, D)  f32
    ln2_w_ref, ln2_b_ref,          # (1, 1, D)    f32
    w_fc_ref, b_fc_ref,            # (1, D, 4D) bf16, (1, 1, 4D) f32
    w_pr_ref, b_pr_ref,            # (1, 4D, D) bf16, (1, 1, D)  f32
    o_ref,                         # (Bt, S, D)   output (written at l == L-1)
    acc_ref,                       # VMEM (Bt, S, D) f32, resident across layers
    *, n_head: int,
):
    l = pl.program_id(1)
    n_layers = pl.num_programs(1)

    @pl.when(l == 0)
    def _():
        acc_ref[...] = x_ref[...].astype(jnp.float32)

    Bt, S, D = acc_ref.shape
    hd = D // n_head
    scale = 1.0 / math.sqrt(hd)
    wdt = w_qkv_ref.dtype                     # matmul compute dtype (bf16)

    x = acc_ref[...].reshape(Bt * S, D)       # (R, D) f32, R = Bt*S

    # ---- attention branch: x + out_proj(MHA(LN1(x))) ----
    h = _layernorm_f32(x, ln1_w_ref[0, 0], ln1_b_ref[0, 0])
    qkv = jnp.dot(h.astype(wdt), w_qkv_ref[0],
                  preferred_element_type=jnp.float32) + b_qkv_ref[0, 0]
    q = qkv[:, 0 * D:1 * D] * scale           # torch MHA scales q by 1/sqrt(hd)
    k = qkv[:, 1 * D:2 * D]
    v = qkv[:, 2 * D:3 * D]

    attn = jnp.zeros((Bt * S, D), jnp.float32)
    for hx in range(n_head):                  # static unroll over heads
        sl = slice(hx * hd, (hx + 1) * hd)
        qh = q[:, sl].reshape(Bt, S, hd).astype(wdt)
        kh = k[:, sl].reshape(Bt, S, hd).astype(wdt)
        vh = v[:, sl].reshape(Bt, S, hd).astype(wdt)
        s = jnp.einsum('bqc,bkc->bqk', qh, kh,
                       preferred_element_type=jnp.float32)           # (Bt,S,S)
        s = s - jnp.max(s, axis=-1, keepdims=True)
        p = jnp.exp(s)                                               # f32
        p = p * pl.reciprocal(jnp.sum(p, axis=-1, keepdims=True), approx=True)
        ctx = jnp.einsum('bqk,bkc->bqc', p.astype(wdt), vh,
                         preferred_element_type=jnp.float32)         # (Bt,S,hd)
        # accumulate this head's output directly through its out_proj rows
        # (removes the lane concatenate entirely)
        attn = attn + jnp.dot(ctx.reshape(Bt * S, hd).astype(wdt),
                              w_out_ref[0, sl, :],
                              preferred_element_type=jnp.float32)
    attn = attn + b_out_ref[0, 0]

    x = x + attn

    # ---- MLP branch: x + c_proj(QuickGELU(c_fc(LN2(x)))) ----
    h2 = _layernorm_f32(x, ln2_w_ref[0, 0], ln2_b_ref[0, 0])
    ff = jnp.dot(h2.astype(wdt), w_fc_ref[0],
                 preferred_element_type=jnp.float32) + b_fc_ref[0, 0]
    ff = _quick_gelu(ff)                                             # f32
    ff = jnp.dot(ff.astype(wdt), w_pr_ref[0],
                 preferred_element_type=jnp.float32) + b_pr_ref[0, 0]

    x = x + ff
    acc_ref[...] = x.reshape(Bt, S, D)

    @pl.when(l == n_layers - 1)
    def _():
        o_ref[...] = acc_ref[...].astype(o_ref.dtype)


def _choose_batch_tile(B, S, D, row_target=1024, bytes_budget=4 << 20):
    """Largest divisor of B whose (Bt,S,D) f32 tile stays under the budgets."""
    bt = 1
    for cand in range(1, B + 1):
        if B % cand:
            continue
        if cand > 1 and cand * S > row_target:
            break
        if cand * S * D * 4 > bytes_budget:
            break
        bt = cand
    return bt


def _stack_and_prepare(layer_params, weight_dtype=jnp.bfloat16):
    """Host-side layout plumbing: pre-transpose big weights to (in, out),
    cast them to `weight_dtype`, and stack everything with a leading L axis."""
    def stack(name, transpose=False, cast=False):
        ws = []
        for p in layer_params:
            w = p[name]
            if transpose:
                w = w.T
            if cast:
                w = w.astype(weight_dtype)
            ws.append(w)
        return jnp.stack(ws, axis=0)

    return dict(
        ln1_w=stack("ln1_w"), ln1_b=stack("ln1_b"),
        w_qkv=stack("in_proj_w", transpose=True, cast=True),   # (L, D, 3D)
        b_qkv=stack("in_proj_b"),                              # (L, 1, 3D)
        w_out=stack("out_proj_w", transpose=True, cast=True),  # (L, D, D)
        b_out=stack("out_proj_b"),                             # (L, 1, D)
        ln2_w=stack("ln2_w"), ln2_b=stack("ln2_b"),
        w_fc=stack("fc_w", transpose=True, cast=True),         # (L, D, 4D)
        b_fc=stack("fc_b"),                                    # (L, 1, 4D)
        w_pr=stack("proj_w", transpose=True, cast=True),       # (L, 4D, D)
        b_pr=stack("proj_b"),                                  # (L, 1, D)
    )


def transformer_forward(x, layer_params, n_head, *, weight_dtype=jnp.bfloat16,
                        batch_tile=None):
    """x: (B, S, D). layer_params: list of per-layer dicts (torch layout)."""
    B, S, D = x.shape
    L = len(layer_params)
    stacked = _stack_and_prepare(layer_params, weight_dtype)
    bt = batch_tile or _choose_batch_tile(B, S, D)

    weight_args = (
        stacked["ln1_w"], stacked["ln1_b"],
        stacked["w_qkv"], stacked["b_qkv"],
        stacked["w_out"], stacked["b_out"],
        stacked["ln2_w"], stacked["ln2_b"],
        stacked["w_fc"], stacked["b_fc"],
        stacked["w_pr"], stacked["b_pr"],
    )

    def layer_spec(a):
        nd = a.ndim
        return pl.BlockSpec((1,) + a.shape[1:],
                            lambda b, l, _nd=nd: (l,) + (0,) * (_nd - 1))

    in_specs = [pl.BlockSpec((bt, S, D), lambda b, l: (b, 0, 0))]
    in_specs += [layer_spec(w) for w in weight_args]

    # VMEM budget: double-buffered per-layer weights + activations +
    # intermediates, with generous headroom (tiny at the test shapes).
    w_item = jnp.dtype(weight_dtype).itemsize
    w_bytes = 2 * (12 * D * D * w_item + 14 * D * 4)        # 2-deep pipeline
    act_bytes = 5 * bt * S * D * 4                          # x(2) + o(2) + acc
    inter_bytes = bt * S * (8 * D) * 4 + 2 * bt * S * S * 4
    vmem_limit = min(max(2 * (w_bytes + act_bytes + inter_bytes) + (8 << 20),
                         16 << 20),
                     100 << 20)

    return pl.pallas_call(
        partial(transformer_kernel, n_head=n_head),
        out_shape=jax.ShapeDtypeStruct((B, S, D), x.dtype),
        grid_spec=pltpu.PrefetchScalarGridSpec(
            num_scalar_prefetch=0,
            grid=(B // bt, L),                   # layer axis last ("arbitrary")
            in_specs=in_specs,
            out_specs=pl.BlockSpec((bt, S, D), lambda b, l: (b, 0, 0)),
            scratch_shapes=[pltpu.VMEM((bt, S, D), jnp.float32)],
        ),
        compiler_params=pltpu.CompilerParams(
            dimension_semantics=("parallel", "arbitrary"),
            vmem_limit_bytes=int(vmem_limit),
        ),
    )(x, *weight_args)


def init_block_params(key, width):
    D = width
    ks = jax.random.split(key, 6)
    s_attn = 1.0 / math.sqrt(D)
    s_fc = 1.0 / math.sqrt(D)
    s_proj = 1.0 / math.sqrt(4 * D)
    return {
        "ln1_w": jnp.ones((1, D), jnp.float32),
        "ln1_b": jnp.zeros((1, D), jnp.float32),
        "ln2_w": jnp.ones((1, D), jnp.float32),
        "ln2_b": jnp.zeros((1, D), jnp.float32),
        "in_proj_w": jax.random.uniform(ks[0], (3 * D, D), jnp.float32,
                                        -s_attn, s_attn),
        "in_proj_b": jnp.zeros((1, 3 * D), jnp.float32),
        "out_proj_w": jax.random.uniform(ks[1], (D, D), jnp.float32,
                                         -s_attn, s_attn),
        "out_proj_b": jnp.zeros((1, D), jnp.float32),
        "fc_w": jax.random.uniform(ks[2], (4 * D, D), jnp.float32, -s_fc, s_fc),
        "fc_b": jax.random.uniform(ks[3], (1, 4 * D), jnp.float32, -s_fc, s_fc),
        "proj_w": jax.random.uniform(ks[4], (D, 4 * D), jnp.float32,
                                     -s_proj, s_proj),
        "proj_b": jax.random.uniform(ks[5], (1, D), jnp.float32,
                                     -s_proj, s_proj),
    }


def _reference_forward(x, layer_params, n_head):
    """Pure-JAX f32 reference of the torch module (sanity check only)."""
    def ln(y, w, b, eps=1e-5):
        mu = y.mean(-1, keepdims=True)
        var = ((y - mu) ** 2).mean(-1, keepdims=True)
        return (y - mu) * jax.lax.rsqrt(var + eps) * w + b

    B, S, D = x.shape
    hd = D // n_head
    for p in layer_params:
        h = ln(x, p["ln1_w"][0], p["ln1_b"][0])
        qkv = h @ p["in_proj_w"].T + p["in_proj_b"][0]
        q, k, v = jnp.split(qkv, 3, axis=-1)
        q = q / math.sqrt(hd)
        qh = q.reshape(B, S, n_head, hd).transpose(0, 2, 1, 3)
        kh = k.reshape(B, S, n_head, hd).transpose(0, 2, 1, 3)
        vh = v.reshape(B, S, n_head, hd).transpose(0, 2, 1, 3)
        s = qh @ kh.transpose(0, 1, 3, 2)
        pa = jax.nn.softmax(s, axis=-1)
        ctx = (pa @ vh).transpose(0, 2, 1, 3).reshape(B, S, D)
        x = x + ctx @ p["out_proj_w"].T + p["out_proj_b"][0]
        h2 = ln(x, p["ln2_w"][0], p["ln2_b"][0])
        ff = h2 @ p["fc_w"].T + p["fc_b"][0]
        ff = ff * jax.nn.sigmoid(1.702 * ff)
        x = x + ff @ p["proj_w"].T + p["proj_b"][0]
    return x


if __name__ == "__main__":
    WIDTH = 32
    LAYERS = 2
    HEADS = 4
    BATCH = 2
    SEQ = 8

    key = jax.random.PRNGKey(0)
    kx, *layer_keys = jax.random.split(key, LAYERS + 1)

    x = jax.random.normal(kx, (BATCH, SEQ, WIDTH), jnp.float32)
    layer_params = [init_block_params(k, WIDTH) for k in layer_keys]

    out = transformer_forward(x, layer_params, HEADS)
    out = jax.block_until_ready(out)

    assert out.shape == (BATCH, SEQ, WIDTH)
    assert jnp.all(jnp.isfinite(out))

    # Loose check against a pure-JAX f32 reference (kernel uses bf16 MXU
    # operands + approx reciprocal, so allow a generous tolerance).
    ref = _reference_forward(x, layer_params, HEADS)
    assert float(jnp.max(jnp.abs(out - ref))) < 0.2

    print("KERNEL_OK")
</pallas_src>

<mosaic_0001>
module attributes {stable_mosaic.version = 11 : i64} {
  func.func @transformer_kernel(%arg0: i32, %arg1: i32, %arg2: memref<2x8x32xf32, #tpu.memory_space<vmem>>, %arg3: memref<1x1x32xf32, #tpu.memory_space<vmem>>, %arg4: memref<1x1x32xf32, #tpu.memory_space<vmem>>, %arg5: memref<1x32x96xbf16, #tpu.memory_space<vmem>>, %arg6: memref<1x1x96xf32, #tpu.memory_space<vmem>>, %arg7: memref<1x32x32xbf16, #tpu.memory_space<vmem>>, %arg8: memref<1x1x32xf32, #tpu.memory_space<vmem>>, %arg9: memref<1x1x32xf32, #tpu.memory_space<vmem>>, %arg10: memref<1x1x32xf32, #tpu.memory_space<vmem>>, %arg11: memref<1x32x128xbf16, #tpu.memory_space<vmem>>, %arg12: memref<1x1x128xf32, #tpu.memory_space<vmem>>, %arg13: memref<1x128x32xbf16, #tpu.memory_space<vmem>>, %arg14: memref<1x1x32xf32, #tpu.memory_space<vmem>>, %arg15: memref<2x8x32xf32, #tpu.memory_space<vmem>>, %arg16: memref<2x8x32xf32, #tpu.memory_space<vmem>>) attributes {dimension_semantics = [#tpu.dimension_semantics<parallel>, #tpu.dimension_semantics<arbitrary>], iteration_bounds = array<i64: 1, 2>, scalar_prefetch = 0 : i64, scratch_operands = 1 : i64, tpu.core_type = #tpu.core_type<tc>, window_params = [{transform_indices = @transform_0, window_bounds = array<i64: 2, 8, 32>}, {transform_indices = @transform_1, window_bounds = array<i64: 1, 1, 32>}, {transform_indices = @transform_2, window_bounds = array<i64: 1, 1, 32>}, {transform_indices = @transform_3, window_bounds = array<i64: 1, 32, 96>}, {transform_indices = @transform_4, window_bounds = array<i64: 1, 1, 96>}, {transform_indices = @transform_5, window_bounds = array<i64: 1, 32, 32>}, {transform_indices = @transform_6, window_bounds = array<i64: 1, 1, 32>}, {transform_indices = @transform_7, window_bounds = array<i64: 1, 1, 32>}, {transform_indices = @transform_8, window_bounds = array<i64: 1, 1, 32>}, {transform_indices = @transform_9, window_bounds = array<i64: 1, 32, 128>}, {transform_indices = @transform_10, window_bounds = array<i64: 1, 1, 128>}, {transform_indices = @transform_11, window_bounds = array<i64: 1, 128, 32>}, {transform_indices = @transform_12, window_bounds = array<i64: 1, 1, 32>}, {transform_indices = @transform_13, window_bounds = array<i64: 2, 8, 32>}]} {
    %c0_i32 = arith.constant 0 : i32
    %0 = arith.cmpi eq, %arg1, %c0_i32 : i32
    %1 = arith.extui %0 : i1 to i32
    %c0_i32_0 = arith.constant 0 : i32
    %2 = arith.cmpi ne, %1, %c0_i32_0 : i32
    scf.if %2 {
      %c0_85 = arith.constant 0 : index
      %c0_86 = arith.constant 0 : index
      %c0_87 = arith.constant 0 : index
      %222 = vector.load %arg2[%c0_85, %c0_86, %c0_87] : memref<2x8x32xf32, #tpu.memory_space<vmem>>, vector<2x8x32xf32>
      %c0_88 = arith.constant 0 : index
      %c0_89 = arith.constant 0 : index
      %c0_90 = arith.constant 0 : index
      %223 = vector.load %arg16[%c0_88, %c0_89, %c0_90] : memref<2x8x32xf32, #tpu.memory_space<vmem>>, vector<2x8x32xf32>
      tpu.vector_store %arg16[%c0_88, %c0_89, %c0_90], %222 {strides = array<i32>} : memref<2x8x32xf32, #tpu.memory_space<vmem>>, vector<2x8x32xf32>,
    } else {
    }
    %c0 = arith.constant 0 : index
    %c0_1 = arith.constant 0 : index
    %c0_2 = arith.constant 0 : index
    %3 = vector.load %arg16[%c0, %c0_1, %c0_2] : memref<2x8x32xf32, #tpu.memory_space<vmem>>, vector<2x8x32xf32>
    %4 = vector.shape_cast %3 : vector<2x8x32xf32> to vector<16x32xf32>
    %c0_3 = arith.constant 0 : index
    %c0_4 = arith.constant 0 : index
    %c0_5 = arith.constant 0 : index
    %5 = vector.load %arg3[%c0_3, %c0_4, %c0_5] : memref<1x1x32xf32, #tpu.memory_space<vmem>>, vector<1x1x32xf32>
    %6 = vector.shape_cast %5 : vector<1x1x32xf32> to vector<32xf32>
    %c0_6 = arith.constant 0 : index
    %c0_7 = arith.constant 0 : index
    %c0_8 = arith.constant 0 : index
    %7 = vector.load %arg4[%c0_6, %c0_7, %c0_8] : memref<1x1x32xf32, #tpu.memory_space<vmem>>, vector<1x1x32xf32>
    %8 = vector.shape_cast %7 : vector<1x1x32xf32> to vector<32xf32>
    %cst = arith.constant dense<0.000000e+00> : vector<16xf32>
    %9 = vector.multi_reduction <add>, %4, %cst [1] : vector<16x32xf32> to vector<16xf32>
    %10 = vector.shape_cast %9 : vector<16xf32> to vector<16x1xf32>
    %cst_9 = arith.constant 3.200000e+01 : f32
    %11 = vector.broadcast %cst_9 : f32 to vector<16x1xf32>
    %12 = arith.divf %10, %11 : vector<16x1xf32>
    %13 = vector.broadcast %12 : vector<16x1xf32> to vector<16x32xf32>
    %14 = arith.subf %4, %13 : vector<16x32xf32>
    %15 = arith.mulf %14, %14 : vector<16x32xf32>
    %cst_10 = arith.constant dense<0.000000e+00> : vector<16xf32>
    %16 = vector.multi_reduction <add>, %15, %cst_10 [1] : vector<16x32xf32> to vector<16xf32>
    %17 = vector.shape_cast %16 : vector<16xf32> to vector<16x1xf32>
    %cst_11 = arith.constant 3.200000e+01 : f32
    %18 = vector.broadcast %cst_11 : f32 to vector<16x1xf32>
    %19 = arith.divf %17, %18 : vector<16x1xf32>
    %cst_12 = arith.constant 9.99999974E-6 : f32
    %20 = vector.broadcast %cst_12 : f32 to vector<16x1xf32>
    %21 = arith.addf %19, %20 : vector<16x1xf32>
    %22 = math.rsqrt %21 : vector<16x1xf32>
    %23 = vector.broadcast %22 : vector<16x1xf32> to vector<16x32xf32>
    %24 = arith.mulf %14, %23 : vector<16x32xf32>
    %25 = vector.shape_cast %6 : vector<32xf32> to vector<1x32xf32>
    %26 = vector.broadcast %25 : vector<1x32xf32> to vector<16x32xf32>
    %27 = arith.mulf %24, %26 : vector<16x32xf32>
    %28 = vector.shape_cast %8 : vector<32xf32> to vector<1x32xf32>
    %29 = vector.broadcast %28 : vector<1x32xf32> to vector<16x32xf32>
    %30 = arith.addf %27, %29 : vector<16x32xf32>
    %31 = arith.truncf %30 : vector<16x32xf32> to vector<16x32xbf16>
    %c0_13 = arith.constant 0 : index
    %c0_14 = arith.constant 0 : index
    %c0_15 = arith.constant 0 : index
    %32 = vector.load %arg5[%c0_13, %c0_14, %c0_15] : memref<1x32x96xbf16, #tpu.memory_space<vmem>>, vector<1x32x96xbf16>
    %33 = vector.shape_cast %32 : vector<1x32x96xbf16> to vector<32x96xbf16>
    %cst_16 = arith.constant dense<0.000000e+00> : vector<16x96xf32>
    %34 = tpu.matmul %31, %33, %cst_16 {dimension_numbers = #tpu.dot_dimension_numbers<[1], [0], [0], [1], [0, 0, 1, 1], [], []>} : vector<16x32xbf16>, vector<32x96xbf16>, vector<16x96xf32> -> vector<16x96xf32>
    %c0_17 = arith.constant 0 : index
    %c0_18 = arith.constant 0 : index
    %c0_19 = arith.constant 0 : index
    %35 = vector.load %arg6[%c0_17, %c0_18, %c0_19] : memref<1x1x96xf32, #tpu.memory_space<vmem>>, vector<1x1x96xf32>
    %36 = vector.shape_cast %35 : vector<1x1x96xf32> to vector<96xf32>
    %37 = vector.shape_cast %36 : vector<96xf32> to vector<1x96xf32>
    %38 = vector.broadcast %37 : vector<1x96xf32> to vector<16x96xf32>
    %39 = arith.addf %34, %38 : vector<16x96xf32>
    %40 = vector.extract_strided_slice %39 {offsets = [0, 0], sizes = [16, 32], strides = [1, 1]} : vector<16x96xf32> to vector<16x32xf32>
    %cst_20 = arith.constant 0.353553385 : f32
    %41 = vector.broadcast %cst_20 : f32 to vector<16x32xf32>
    %42 = arith.mulf %40, %41 : vector<16x32xf32>
    %43 = vector.extract_strided_slice %39 {offsets = [0, 32], sizes = [16, 32], strides = [1, 1]} : vector<16x96xf32> to vector<16x32xf32>
    %44 = vector.extract_strided_slice %39 {offsets = [0, 64], sizes = [16, 32], strides = [1, 1]} : vector<16x96xf32> to vector<16x32xf32>
    %cst_21 = arith.constant 0.000000e+00 : f32
    %45 = vector.broadcast %cst_21 : f32 to vector<16x32xf32>
    %46 = vector.extract_strided_slice %42 {offsets = [0, 0], sizes = [16, 8], strides = [1, 1]} : vector<16x32xf32> to vector<16x8xf32>
    %47 = vector.shape_cast %46 : vector<16x8xf32> to vector<2x8x8xf32>
    %48 = arith.truncf %47 : vector<2x8x8xf32> to vector<2x8x8xbf16>
    %49 = vector.extract_strided_slice %43 {offsets = [0, 0], sizes = [16, 8], strides = [1, 1]} : vector<16x32xf32> to vector<16x8xf32>
    %50 = vector.shape_cast %49 : vector<16x8xf32> to vector<2x8x8xf32>
    %51 = arith.truncf %50 : vector<2x8x8xf32> to vector<2x8x8xbf16>
    %52 = vector.extract_strided_slice %44 {offsets = [0, 0], sizes = [16, 8], strides = [1, 1]} : vector<16x32xf32> to vector<16x8xf32>
    %53 = vector.shape_cast %52 : vector<16x8xf32> to vector<2x8x8xf32>
    %54 = arith.truncf %53 : vector<2x8x8xf32> to vector<2x8x8xbf16>
    "tpu.trace_start"() <{level = 10 : i32, message = "bqc,bkc->bqk"}> : () -> ()
    %cst_22 = arith.constant dense<0.000000e+00> : vector<2x8x8xf32>
    %55 = tpu.matmul %48, %51, %cst_22 {dimension_numbers = #tpu.dot_dimension_numbers<[2], [2], [1], [1], [0, 0, 0, 1, 1, 1], [0], [0]>} : vector<2x8x8xbf16>, vector<2x8x8xbf16>, vector<2x8x8xf32> -> vector<2x8x8xf32>
    "tpu.trace_stop"() : () -> ()
    %cst_23 = arith.constant dense<0xFF800000> : vector<2x8xf32>
    %56 = vector.multi_reduction <maximumf>, %55, %cst_23 [2] : vector<2x8x8xf32> to vector<2x8xf32>
    %57 = vector.shape_cast %56 : vector<2x8xf32> to vector<2x8x1xf32>
    %58 = vector.broadcast %57 : vector<2x8x1xf32> to vector<2x8x8xf32>
    %59 = arith.subf %55, %58 : vector<2x8x8xf32>
    %60 = math.exp %59 : vector<2x8x8xf32>
    %cst_24 = arith.constant dense<0.000000e+00> : vector<2x8xf32>
    %61 = vector.multi_reduction <add>, %60, %cst_24 [2] : vector<2x8x8xf32> to vector<2x8xf32>
    %62 = vector.shape_cast %61 : vector<2x8xf32> to vector<2x8x1xf32>
    %63 = tpu.reciprocal %62 {approx = true} : vector<2x8x1xf32> -> vector<2x8x1xf32>
    %64 = vector.broadcast %63 : vector<2x8x1xf32> to vector<2x8x8xf32>
    %65 = arith.mulf %60, %64 : vector<2x8x8xf32>
    %66 = arith.truncf %65 : vector<2x8x8xf32> to vector<2x8x8xbf16>
    "tpu.trace_start"() <{level = 10 : i32, message = "bqk,bkc->bqc"}> : () -> ()
    %cst_25 = arith.constant dense<0.000000e+00> : vector<2x8x8xf32>
    %67 = tpu.matmul %66, %54, %cst_25 {dimension_numbers = #tpu.dot_dimension_numbers<[2], [1], [1], [2], [0, 0, 0, 1, 1, 2], [0], [0]>} : vector<2x8x8xbf16>, vector<2x8x8xbf16>, vector<2x8x8xf32> -> vector<2x8x8xf32>
    "tpu.trace_stop"() : () -> ()
    %68 = vector.shape_cast %67 : vector<2x8x8xf32> to vector<16x8xf32>
    %69 = arith.truncf %68 : vector<16x8xf32> to vector<16x8xbf16>
    %c0_26 = arith.constant 0 : index
    %c0_27 = arith.constant 0 : index
    %c0_28 = arith.constant 0 : index
    %70 = vector.load %arg7[%c0_26, %c0_27, %c0_28] : memref<1x32x32xbf16, #tpu.memory_space<vmem>>, vector<1x8x32xbf16>
    %71 = vector.shape_cast %70 : vector<1x8x32xbf16> to vector<8x32xbf16>
    %cst_29 = arith.constant dense<0.000000e+00> : vector<16x32xf32>
    %72 = tpu.matmul %69, %71, %cst_29 {dimension_numbers = #tpu.dot_dimension_numbers<[1], [0], [0], [1], [0, 0, 1, 1], [], []>} : vector<16x8xbf16>, vector<8x32xbf16>, vector<16x32xf32> -> vector<16x32xf32>
    %73 = arith.addf %45, %72 : vector<16x32xf32>
    %74 = vector.extract_strided_slice %42 {offsets = [0, 8], sizes = [16, 8], strides = [1, 1]} : vector<16x32xf32> to vector<16x8xf32>
    %75 = vector.shape_cast %74 : vector<16x8xf32> to vector<2x8x8xf32>
    %76 = arith.truncf %75 : vector<2x8x8xf32> to vector<2x8x8xbf16>
    %77 = vector.extract_strided_slice %43 {offsets = [0, 8], sizes = [16, 8], strides = [1, 1]} : vector<16x32xf32> to vector<16x8xf32>
    %78 = vector.shape_cast %77 : vector<16x8xf32> to vector<2x8x8xf32>
    %79 = arith.truncf %78 : vector<2x8x8xf32> to vector<2x8x8xbf16>
    %80 = vector.extract_strided_slice %44 {offsets = [0, 8], sizes = [16, 8], strides = [1, 1]} : vector<16x32xf32> to vector<16x8xf32>
    %81 = vector.shape_cast %80 : vector<16x8xf32> to vector<2x8x8xf32>
    %82 = arith.truncf %81 : vector<2x8x8xf32> to vector<2x8x8xbf16>
    "tpu.trace_start"() <{level = 10 : i32, message = "bqc,bkc->bqk"}> : () -> ()
    %cst_30 = arith.constant dense<0.000000e+00> : vector<2x8x8xf32>
    %83 = tpu.matmul %76, %79, %cst_30 {dimension_numbers = #tpu.dot_dimension_numbers<[2], [2], [1], [1], [0, 0, 0, 1, 1, 1], [0], [0]>} : vector<2x8x8xbf16>, vector<2x8x8xbf16>, vector<2x8x8xf32> -> vector<2x8x8xf32>
    "tpu.trace_stop"() : () -> ()
    %cst_31 = arith.constant dense<0xFF800000> : vector<2x8xf32>
    %84 = vector.multi_reduction <maximumf>, %83, %cst_31 [2] : vector<2x8x8xf32> to vector<2x8xf32>
    %85 = vector.shape_cast %84 : vector<2x8xf32> to vector<2x8x1xf32>
    %86 = vector.broadcast %85 : vector<2x8x1xf32> to vector<2x8x8xf32>
    %87 = arith.subf %83, %86 : vector<2x8x8xf32>
    %88 = math.exp %87 : vector<2x8x8xf32>
    %cst_32 = arith.constant dense<0.000000e+00> : vector<2x8xf32>
    %89 = vector.multi_reduction <add>, %88, %cst_32 [2] : vector<2x8x8xf32> to vector<2x8xf32>
    %90 = vector.shape_cast %89 : vector<2x8xf32> to vector<2x8x1xf32>
    %91 = tpu.reciprocal %90 {approx = true} : vector<2x8x1xf32> -> vector<2x8x1xf32>
    %92 = vector.broadcast %91 : vector<2x8x1xf32> to vector<2x8x8xf32>
    %93 = arith.mulf %88, %92 : vector<2x8x8xf32>
    %94 = arith.truncf %93 : vector<2x8x8xf32> to vector<2x8x8xbf16>
    "tpu.trace_start"() <{level = 10 : i32, message = "bqk,bkc->bqc"}> : () -> ()
    %cst_33 = arith.constant dense<0.000000e+00> : vector<2x8x8xf32>
    %95 = tpu.matmul %94, %82, %cst_33 {dimension_numbers = #tpu.dot_dimension_numbers<[2], [1], [1], [2], [0, 0, 0, 1, 1, 2], [0], [0]>} : vector<2x8x8xbf16>, vector<2x8x8xbf16>, vector<2x8x8xf32> -> vector<2x8x8xf32>
    "tpu.trace_stop"() : () -> ()
    %96 = vector.shape_cast %95 : vector<2x8x8xf32> to vector<16x8xf32>
    %97 = arith.truncf %96 : vector<16x8xf32> to vector<16x8xbf16>
    %c0_34 = arith.constant 0 : index
    %c8 = arith.constant 8 : index
    %c0_35 = arith.constant 0 : index
    %98 = vector.load %arg7[%c0_34, %c8, %c0_35] : memref<1x32x32xbf16, #tpu.memory_space<vmem>>, vector<1x8x32xbf16>
    %99 = vector.shape_cast %98 : vector<1x8x32xbf16> to vector<8x32xbf16>
    %cst_36 = arith.constant dense<0.000000e+00> : vector<16x32xf32>
    %100 = tpu.matmul %97, %99, %cst_36 {dimension_numbers = #tpu.dot_dimension_numbers<[1], [0], [0], [1], [0, 0, 1, 1], [], []>} : vector<16x8xbf16>, vector<8x32xbf16>, vector<16x32xf32> -> vector<16x32xf32>
    %101 = arith.addf %73, %100 : vector<16x32xf32>
    %102 = vector.extract_strided_slice %42 {offsets = [0, 16], sizes = [16, 8], strides = [1, 1]} : vector<16x32xf32> to vector<16x8xf32>
    %103 = vector.shape_cast %102 : vector<16x8xf32> to vector<2x8x8xf32>
    %104 = arith.truncf %103 : vector<2x8x8xf32> to vector<2x8x8xbf16>
    %105 = vector.extract_strided_slice %43 {offsets = [0, 16], sizes = [16, 8], strides = [1, 1]} : vector<16x32xf32> to vector<16x8xf32>
    %106 = vector.shape_cast %105 : vector<16x8xf32> to vector<2x8x8xf32>
    %107 = arith.truncf %106 : vector<2x8x8xf32> to vector<2x8x8xbf16>
    %108 = vector.extract_strided_slice %44 {offsets = [0, 16], sizes = [16, 8], strides = [1, 1]} : vector<16x32xf32> to vector<16x8xf32>
    %109 = vector.shape_cast %108 : vector<16x8xf32> to vector<2x8x8xf32>
    %110 = arith.truncf %109 : vector<2x8x8xf32> to vector<2x8x8xbf16>
    "tpu.trace_start"() <{level = 10 : i32, message = "bqc,bkc->bqk"}> : () -> ()
    %cst_37 = arith.constant dense<0.000000e+00> : vector<2x8x8xf32>
    %111 = tpu.matmul %104, %107, %cst_37 {dimension_numbers = #tpu.dot_dimension_numbers<[2], [2], [1], [1], [0, 0, 0, 1, 1, 1], [0], [0]>} : vector<2x8x8xbf16>, vector<2x8x8xbf16>, vector<2x8x8xf32> -> vector<2x8x8xf32>
    "tpu.trace_stop"() : () -> ()
    %cst_38 = arith.constant dense<0xFF800000> : vector<2x8xf32>
    %112 = vector.multi_reduction <maximumf>, %111, %cst_38 [2] : vector<2x8x8xf32> to vector<2x8xf32>
    %113 = vector.shape_cast %112 : vector<2x8xf32> to vector<2x8x1xf32>
    %114 = vector.broadcast %113 : vector<2x8x1xf32> to vector<2x8x8xf32>
    %115 = arith.subf %111, %114 : vector<2x8x8xf32>
    %116 = math.exp %115 : vector<2x8x8xf32>
    %cst_39 = arith.constant dense<0.000000e+00> : vector<2x8xf32>
    %117 = vector.multi_reduction <add>, %116, %cst_39 [2] : vector<2x8x8xf32> to vector<2x8xf32>
    %118 = vector.shape_cast %117 : vector<2x8xf32> to vector<2x8x1xf32>
    %119 = tpu.reciprocal %118 {approx = true} : vector<2x8x1xf32> -> vector<2x8x1xf32>
    %120 = vector.broadcast %119 : vector<2x8x1xf32> to vector<2x8x8xf32>
    %121 = arith.mulf %116, %120 : vector<2x8x8xf32>
    %122 = arith.truncf %121 : vector<2x8x8xf32> to vector<2x8x8xbf16>
    "tpu.trace_start"() <{level = 10 : i32, message = "bqk,bkc->bqc"}> : () -> ()
    %cst_40 = arith.constant dense<0.000000e+00> : vector<2x8x8xf32>
    %123 = tpu.matmul %122, %110, %cst_40 {dimension_numbers = #tpu.dot_dimension_numbers<[2], [1], [1], [2], [0, 0, 0, 1, 1, 2], [0], [0]>} : vector<2x8x8xbf16>, vector<2x8x8xbf16>, vector<2x8x8xf32> -> vector<2x8x8xf32>
    "tpu.trace_stop"() : () -> ()
    %124 = vector.shape_cast %123 : vector<2x8x8xf32> to vector<16x8xf32>
    %125 = arith.truncf %124 : vector<16x8xf32> to vector<16x8xbf16>
    %c0_41 = arith.constant 0 : index
    %c16 = arith.constant 16 : index
    %c0_42 = arith.constant 0 : index
    %126 = vector.load %arg7[%c0_41, %c16, %c0_42] : memref<1x32x32xbf16, #tpu.memory_space<vmem>>, vector<1x8x32xbf16>
    %127 = vector.shape_cast %126 : vector<1x8x32xbf16> to vector<8x32xbf16>
    %cst_43 = arith.constant dense<0.000000e+00> : vector<16x32xf32>
    %128 = tpu.matmul %125, %127, %cst_43 {dimension_numbers = #tpu.dot_dimension_numbers<[1], [0], [0], [1], [0, 0, 1, 1], [], []>} : vector<16x8xbf16>, vector<8x32xbf16>, vector<16x32xf32> -> vector<16x32xf32>
    %129 = arith.addf %101, %128 : vector<16x32xf32>
    %130 = vector.extract_strided_slice %42 {offsets = [0, 24], sizes = [16, 8], strides = [1, 1]} : vector<16x32xf32> to vector<16x8xf32>
    %131 = vector.shape_cast %130 : vector<16x8xf32> to vector<2x8x8xf32>
    %132 = arith.truncf %131 : vector<2x8x8xf32> to vector<2x8x8xbf16>
    %133 = vector.extract_strided_slice %43 {offsets = [0, 24], sizes = [16, 8], strides = [1, 1]} : vector<16x32xf32> to vector<16x8xf32>
    %134 = vector.shape_cast %133 : vector<16x8xf32> to vector<2x8x8xf32>
    %135 = arith.truncf %134 : vector<2x8x8xf32> to vector<2x8x8xbf16>
    %136 = vector.extract_strided_slice %44 {offsets = [0, 24], sizes = [16, 8], strides = [1, 1]} : vector<16x32xf32> to vector<16x8xf32>
    %137 = vector.shape_cast %136 : vector<16x8xf32> to vector<2x8x8xf32>
    %138 = arith.truncf %137 : vector<2x8x8xf32> to vector<2x8x8xbf16>
    "tpu.trace_start"() <{level = 10 : i32, message = "bqc,bkc->bqk"}> : () -> ()
    %cst_44 = arith.constant dense<0.000000e+00> : vector<2x8x8xf32>
    %139 = tpu.matmul %132, %135, %cst_44 {dimension_numbers = #tpu.dot_dimension_numbers<[2], [2], [1], [1], [0, 0, 0, 1, 1, 1], [0], [0]>} : vector<2x8x8xbf16>, vector<2x8x8xbf16>, vector<2x8x8xf32> -> vector<2x8x8xf32>
    "tpu.trace_stop"() : () -> ()
    %cst_45 = arith.constant dense<0xFF800000> : vector<2x8xf32>
    %140 = vector.multi_reduction <maximumf>, %139, %cst_45 [2] : vector<2x8x8xf32> to vector<2x8xf32>
    %141 = vector.shape_cast %140 : vector<2x8xf32> to vector<2x8x1xf32>
    %142 = vector.broadcast %141 : vector<2x8x1xf32> to vector<2x8x8xf32>
    %143 = arith.subf %139, %142 : vector<2x8x8xf32>
    %144 = math.exp %143 : vector<2x8x8xf32>
    %cst_46 = arith.constant dense<0.000000e+00> : vector<2x8xf32>
    %145 = vector.multi_reduction <add>, %144, %cst_46 [2] : vector<2x8x8xf32> to vector<2x8xf32>
    %146 = vector.shape_cast %145 : vector<2x8xf32> to vector<2x8x1xf32>
    %147 = tpu.reciprocal %146 {approx = true} : vector<2x8x1xf32> -> vector<2x8x1xf32>
    %148 = vector.broadcast %147 : vector<2x8x1xf32> to vector<2x8x8xf32>
    %149 = arith.mulf %144, %148 : vector<2x8x8xf32>
    %150 = arith.truncf %149 : vector<2x8x8xf32> to vector<2x8x8xbf16>
    "tpu.trace_start"() <{level = 10 : i32, message = "bqk,bkc->bqc"}> : () -> ()
    %cst_47 = arith.constant dense<0.000000e+00> : vector<2x8x8xf32>
    %151 = tpu.matmul %150, %138, %cst_47 {dimension_numbers = #tpu.dot_dimension_numbers<[2], [1], [1], [2], [0, 0, 0, 1, 1, 2], [0], [0]>} : vector<2x8x8xbf16>, vector<2x8x8xbf16>, vector<2x8x8xf32> -> vector<2x8x8xf32>
    "tpu.trace_stop"() : () -> ()
    %152 = vector.shape_cast %151 : vector<2x8x8xf32> to vector<16x8xf32>
    %153 = arith.truncf %152 : vector<16x8xf32> to vector<16x8xbf16>
    %c0_48 = arith.constant 0 : index
    %c24 = arith.constant 24 : index
    %c0_49 = arith.constant 0 : index
    %154 = vector.load %arg7[%c0_48, %c24, %c0_49] : memref<1x32x32xbf16, #tpu.memory_space<vmem>>, vector<1x8x32xbf16>
    %155 = vector.shape_cast %154 : vector<1x8x32xbf16> to vector<8x32xbf16>
    %cst_50 = arith.constant dense<0.000000e+00> : vector<16x32xf32>
    %156 = tpu.matmul %153, %155, %cst_50 {dimension_numbers = #tpu.dot_dimension_numbers<[1], [0], [0], [1], [0, 0, 1, 1], [], []>} : vector<16x8xbf16>, vector<8x32xbf16>, vector<16x32xf32> -> vector<16x32xf32>
    %157 = arith.addf %129, %156 : vector<16x32xf32>
    %c0_51 = arith.constant 0 : index
    %c0_52 = arith.constant 0 : index
    %c0_53 = arith.constant 0 : index
    %158 = vector.load %arg8[%c0_51, %c0_52, %c0_53] : memref<1x1x32xf32, #tpu.memory_space<vmem>>, vector<1x1x32xf32>
    %159 = vector.shape_cast %158 : vector<1x1x32xf32> to vector<32xf32>
    %160 = vector.shape_cast %159 : vector<32xf32> to vector<1x32xf32>
    %161 = vector.broadcast %160 : vector<1x32xf32> to vector<16x32xf32>
    %162 = arith.addf %157, %161 : vector<16x32xf32>
    %163 = arith.addf %4, %162 : vector<16x32xf32>
    %c0_54 = arith.constant 0 : index
    %c0_55 = arith.constant 0 : index
    %c0_56 = arith.constant 0 : index
    %164 = vector.load %arg9[%c0_54, %c0_55, %c0_56] : memref<1x1x32xf32, #tpu.memory_space<vmem>>, vector<1x1x32xf32>
    %165 = vector.shape_cast %164 : vector<1x1x32xf32> to vector<32xf32>
    %c0_57 = arith.constant 0 : index
    %c0_58 = arith.constant 0 : index
    %c0_59 = arith.constant 0 : index
    %166 = vector.load %arg10[%c0_57, %c0_58, %c0_59] : memref<1x1x32xf32, #tpu.memory_space<vmem>>, vector<1x1x32xf32>
    %167 = vector.shape_cast %166 : vector<1x1x32xf32> to vector<32xf32>
    %cst_60 = arith.constant dense<0.000000e+00> : vector<16xf32>
    %168 = vector.multi_reduction <add>, %163, %cst_60 [1] : vector<16x32xf32> to vector<16xf32>
    %169 = vector.shape_cast %168 : vector<16xf32> to vector<16x1xf32>
    %cst_61 = arith.constant 3.200000e+01 : f32
    %170 = vector.broadcast %cst_61 : f32 to vector<16x1xf32>
    %171 = arith.divf %169, %170 : vector<16x1xf32>
    %172 = vector.broadcast %171 : vector<16x1xf32> to vector<16x32xf32>
    %173 = arith.subf %163, %172 : vector<16x32xf32>
    %174 = arith.mulf %173, %173 : vector<16x32xf32>
    %cst_62 = arith.constant dense<0.000000e+00> : vector<16xf32>
    %175 = vector.multi_reduction <add>, %174, %cst_62 [1] : vector<16x32xf32> to vector<16xf32>
    %176 = vector.shape_cast %175 : vector<16xf32> to vector<16x1xf32>
    %cst_63 = arith.constant 3.200000e+01 : f32
    %177 = vector.broadcast %cst_63 : f32 to vector<16x1xf32>
    %178 = arith.divf %176, %177 : vector<16x1xf32>
    %cst_64 = arith.constant 9.99999974E-6 : f32
    %179 = vector.broadcast %cst_64 : f32 to vector<16x1xf32>
    %180 = arith.addf %178, %179 : vector<16x1xf32>
    %181 = math.rsqrt %180 : vector<16x1xf32>
    %182 = vector.broadcast %181 : vector<16x1xf32> to vector<16x32xf32>
    %183 = arith.mulf %173, %182 : vector<16x32xf32>
    %184 = vector.shape_cast %165 : vector<32xf32> to vector<1x32xf32>
    %185 = vector.broadcast %184 : vector<1x32xf32> to vector<16x32xf32>
    %186 = arith.mulf %183, %185 : vector<16x32xf32>
    %187 = vector.shape_cast %167 : vector<32xf32> to vector<1x32xf32>
    %188 = vector.broadcast %187 : vector<1x32xf32> to vector<16x32xf32>
    %189 = arith.addf %186, %188 : vector<16x32xf32>
    %190 = arith.truncf %189 : vector<16x32xf32> to vector<16x32xbf16>
    %c0_65 = arith.constant 0 : index
    %c0_66 = arith.constant 0 : index
    %c0_67 = arith.constant 0 : index
    %191 = vector.load %arg11[%c0_65, %c0_66, %c0_67] : memref<1x32x128xbf16, #tpu.memory_space<vmem>>, vector<1x32x128xbf16>
    %192 = vector.shape_cast %191 : vector<1x32x128xbf16> to vector<32x128xbf16>
    %cst_68 = arith.constant dense<0.000000e+00> : vector<16x128xf32>
    %193 = tpu.matmul %190, %192, %cst_68 {dimension_numbers = #tpu.dot_dimension_numbers<[1], [0], [0], [1], [0, 0, 1, 1], [], []>} : vector<16x32xbf16>, vector<32x128xbf16>, vector<16x128xf32> -> vector<16x128xf32>
    %c0_69 = arith.constant 0 : index
    %c0_70 = arith.constant 0 : index
    %c0_71 = arith.constant 0 : index
    %194 = vector.load %arg12[%c0_69, %c0_70, %c0_71] : memref<1x1x128xf32, #tpu.memory_space<vmem>>, vector<1x1x128xf32>
    %195 = vector.shape_cast %194 : vector<1x1x128xf32> to vector<128xf32>
    %196 = vector.shape_cast %195 : vector<128xf32> to vector<1x128xf32>
    %197 = vector.broadcast %196 : vector<1x128xf32> to vector<16x128xf32>
    %198 = arith.addf %193, %197 : vector<16x128xf32>
    %cst_72 = arith.constant 1.702000e+00 : f32
    %199 = vector.broadcast %cst_72 : f32 to vector<16x128xf32>
    %200 = arith.mulf %199, %198 : vector<16x128xf32>
    %201 = arith.negf %200 : vector<16x128xf32>
    %202 = math.exp %201 : vector<16x128xf32>
    %cst_73 = arith.constant 1.000000e+00 : f32
    %203 = vector.broadcast %cst_73 : f32 to vector<16x128xf32>
    %204 = arith.addf %203, %202 : vector<16x128xf32>
    %205 = arith.divf %203, %204 : vector<16x128xf32>
    %206 = arith.mulf %198, %205 : vector<16x128xf32>
    %207 = arith.truncf %206 : vector<16x128xf32> to vector<16x128xbf16>
    %c0_74 = arith.constant 0 : index
    %c0_75 = arith.constant 0 : index
    %c0_76 = arith.constant 0 : index
    %208 = vector.load %arg13[%c0_74, %c0_75, %c0_76] : memref<1x128x32xbf16, #tpu.memory_space<vmem>>, vector<1x128x32xbf16>
    %209 = vector.shape_cast %208 : vector<1x128x32xbf16> to vector<128x32xbf16>
    %cst_77 = arith.constant dense<0.000000e+00> : vector<16x32xf32>
    %210 = tpu.matmul %207, %209, %cst_77 {dimension_numbers = #tpu.dot_dimension_numbers<[1], [0], [0], [1], [0, 0, 1, 1], [], []>} : vector<16x128xbf16>, vector<128x32xbf16>, vector<16x32xf32> -> vector<16x32xf32>
    %c0_78 = arith.constant 0 : index
    %c0_79 = arith.constant 0 : index
    %c0_80 = arith.constant 0 : index
    %211 = vector.load %arg14[%c0_78, %c0_79, %c0_80] : memref<1x1x32xf32, #tpu.memory_space<vmem>>, vector<1x1x32xf32>
    %212 = vector.shape_cast %211 : vector<1x1x32xf32> to vector<32xf32>
    %213 = vector.shape_cast %212 : vector<32xf32> to vector<1x32xf32>
    %214 = vector.broadcast %213 : vector<1x32xf32> to vector<16x32xf32>
    %215 = arith.addf %210, %214 : vector<16x32xf32>
    %216 = arith.addf %163, %215 : vector<16x32xf32>
    %217 = vector.shape_cast %216 : vector<16x32xf32> to vector<2x8x32xf32>
    %c0_81 = arith.constant 0 : index
    %c0_82 = arith.constant 0 : index
    %c0_83 = arith.constant 0 : index
    %218 = vector.load %arg16[%c0_81, %c0_82, %c0_83] : memref<2x8x32xf32, #tpu.memory_space<vmem>>, vector<2x8x32xf32>
    tpu.vector_store %arg16[%c0_81, %c0_82, %c0_83], %217 {strides = array<i32>} : memref<2x8x32xf32, #tpu.memory_space<vmem>>, vector<2x8x32xf32>,
    %c1_i32 = arith.constant 1 : i32
    %219 = arith.cmpi eq, %arg1, %c1_i32 : i32
    %220 = arith.extui %219 : i1 to i32
    %c0_i32_84 = arith.constant 0 : i32
    %221 = arith.cmpi ne, %220, %c0_i32_84 : i32
    scf.if %221 {
      %c0_85 = arith.constant 0 : index
      %c0_86 = arith.constant 0 : index
      %c0_87 = arith.constant 0 : index
      %222 = vector.load %arg16[%c0_85, %c0_86, %c0_87] : memref<2x8x32xf32, #tpu.memory_space<vmem>>, vector<2x8x32xf32>
      %c0_88 = arith.constant 0 : index
      %c0_89 = arith.constant 0 : index
      %c0_90 = arith.constant 0 : index
      %223 = vector.load %arg15[%c0_88, %c0_89, %c0_90] : memref<2x8x32xf32, #tpu.memory_space<vmem>>, vector<2x8x32xf32>
      tpu.vector_store %arg15[%c0_88, %c0_89, %c0_90], %222 {strides = array<i32>} : memref<2x8x32xf32, #tpu.memory_space<vmem>>, vector<2x8x32xf32>,
    } else {
    }
    return
  }
  func.func @transform_0(%arg0: i32, %arg1: i32) -> (i32, i32, i32) {
    %c0_i32 = arith.constant 0 : i32
    %c0_i32_0 = arith.constant 0 : i32
    %c0_i32_1 = arith.constant 0 : i32
    return %arg0, %c0_i32, %c0_i32_0 : i32, i32, i32
  }
  func.func @transform_1(%arg0: i32, %arg1: i32) -> (i32, i32, i32) {
    %c0_i32 = arith.constant 0 : i32
    %c0_i32_0 = arith.constant 0 : i32
    %c0_i32_1 = arith.constant 0 : i32
    return %arg1, %c0_i32, %c0_i32_0 : i32, i32, i32
  }
  func.func @transform_2(%arg0: i32, %arg1: i32) -> (i32, i32, i32) {
    %c0_i32 = arith.constant 0 : i32
    %c0_i32_0 = arith.constant 0 : i32
    %c0_i32_1 = arith.constant 0 : i32
    return %arg1, %c0_i32, %c0_i32_0 : i32, i32, i32
  }
  func.func @transform_3(%arg0: i32, %arg1: i32) -> (i32, i32, i32) {
    %c0_i32 = arith.constant 0 : i32
    %c0_i32_0 = arith.constant 0 : i32
    %c0_i32_1 = arith.constant 0 : i32
    return %arg1, %c0_i32, %c0_i32_0 : i32, i32, i32
  }
  func.func @transform_4(%arg0: i32, %arg1: i32) -> (i32, i32, i32) {
    %c0_i32 = arith.constant 0 : i32
    %c0_i32_0 = arith.constant 0 : i32
    %c0_i32_1 = arith.constant 0 : i32
    return %arg1, %c0_i32, %c0_i32_0 : i32, i32, i32
  }
  func.func @transform_5(%arg0: i32, %arg1: i32) -> (i32, i32, i32) {
    %c0_i32 = arith.constant 0 : i32
    %c0_i32_0 = arith.constant 0 : i32
    %c0_i32_1 = arith.constant 0 : i32
    return %arg1, %c0_i32, %c0_i32_0 : i32, i32, i32
  }
  func.func @transform_6(%arg0: i32, %arg1: i32) -> (i32, i32, i32) {
    %c0_i32 = arith.constant 0 : i32
    %c0_i32_0 = arith.constant 0 : i32
    %c0_i32_1 = arith.constant 0 : i32
    return %arg1, %c0_i32, %c0_i32_0 : i32, i32, i32
  }
  func.func @transform_7(%arg0: i32, %arg1: i32) -> (i32, i32, i32) {
    %c0_i32 = arith.constant 0 : i32
    %c0_i32_0 = arith.constant 0 : i32
    %c0_i32_1 = arith.constant 0 : i32
    return %arg1, %c0_i32, %c0_i32_0 : i32, i32, i32
  }
  func.func @transform_8(%arg0: i32, %arg1: i32) -> (i32, i32, i32) {
    %c0_i32 = arith.constant 0 : i32
    %c0_i32_0 = arith.constant 0 : i32
    %c0_i32_1 = arith.constant 0 : i32
    return %arg1, %c0_i32, %c0_i32_0 : i32, i32, i32
  }
  func.func @transform_9(%arg0: i32, %arg1: i32) -> (i32, i32, i32) {
    %c0_i32 = arith.constant 0 : i32
    %c0_i32_0 = arith.constant 0 : i32
    %c0_i32_1 = arith.constant 0 : i32
    return %arg1, %c0_i32, %c0_i32_0 : i32, i32, i32
  }
  func.func @transform_10(%arg0: i32, %arg1: i32) -> (i32, i32, i32) {
    %c0_i32 = arith.constant 0 : i32
    %c0_i32_0 = arith.constant 0 : i32
    %c0_i32_1 = arith.constant 0 : i32
    return %arg1, %c0_i32, %c0_i32_0 : i32, i32, i32
  }
  func.func @transform_11(%arg0: i32, %arg1: i32) -> (i32, i32, i32) {
    %c0_i32 = arith.constant 0 : i32
    %c0_i32_0 = arith.constant 0 : i32
    %c0_i32_1 = arith.constant 0 : i32
    return %arg1, %c0_i32, %c0_i32_0 : i32, i32, i32
  }
  func.func @transform_12(%arg0: i32, %arg1: i32) -> (i32, i32, i32) {
    %c0_i32 = arith.constant 0 : i32
    %c0_i32_0 = arith.constant 0 : i32
    %c0_i32_1 = arith.constant 0 : i32
    return %arg1, %c0_i32, %c0_i32_0 : i32, i32, i32
  }
  func.func @transform_13(%arg0: i32, %arg1: i32) -> (i32, i32, i32) {
    %c0_i32 = arith.constant 0 : i32
    %c0_i32_0 = arith.constant 0 : i32
    %c0_i32_1 = arith.constant 0 : i32
    return %arg0, %c0_i32, %c0_i32_0 : i32, i32, i32
  }
}

</mosaic_0001>

<llo_original>
// kernel: tpu_custom_call.1
$region0: #{tpu_custom_call.1}
  #allocation0 [shape = 'u32[]', space=smem, size = 0x4, offset = 0x4, fixed_abs, tag = 'smem constant byte address 0x4 - core index']
  #allocation1 [shape = 'u32[144,128]{1,0:T(1,128)}', space=vmem, size = 0x12000, scoped, tag = 'internal scratch']
  #allocation2 [shape = 'f32[2,8,32]{2,1,0:T(8,128)}', space=vmem, size = 0x2000, scoped, tag = 'scratch operand']
  %s0 = inlined_call_operand.vmem [shape: f32[2,8,32], index: 0, kind: input, shape index: {}]
  %s1 = inlined_call_operand.vmem [shape: f32[2,1,32], index: 1, kind: input, shape index: {}]
  %s2 = inlined_call_operand.vmem [shape: f32[2,1,32], index: 2, kind: input, shape index: {}]
  %s3 = inlined_call_operand.vmem [shape: bf16[2,32,96], index: 3, kind: input, shape index: {}]
  %s4 = inlined_call_operand.vmem [shape: f32[2,1,96], index: 4, kind: input, shape index: {}]
  %s5 = inlined_call_operand.vmem [shape: bf16[2,32,32], index: 5, kind: input, shape index: {}]
  %s6 = inlined_call_operand.vmem [shape: f32[2,1,32], index: 6, kind: input, shape index: {}]
  %s7 = inlined_call_operand.vmem [shape: f32[2,1,32], index: 7, kind: input, shape index: {}]
  %s8 = inlined_call_operand.vmem [shape: f32[2,1,32], index: 8, kind: input, shape index: {}]
  %s9 = inlined_call_operand.vmem [shape: bf16[2,32,128], index: 9, kind: input, shape index: {}]
  %s10 = inlined_call_operand.vmem [shape: f32[2,1,128], index: 10, kind: input, shape index: {}]
  %s11 = inlined_call_operand.vmem [shape: bf16[2,128,32], index: 11, kind: input, shape index: {}]
  %s12 = inlined_call_operand.vmem [shape: f32[2,1,32], index: 12, kind: input, shape index: {}]
  %s13 = inlined_call_operand.hbm [shape: f32[2,8,32], index: 13, kind: output, shape index: {}]
  %s14 = sld [smem:[#allocation0]]
  $region93: #{tpu_custom_call.1} parent=0
    _
  %s16 = ssub.s32 1, %s14
  %s17 = scalar_select 0, %s16, %s14
  $region1: #{tpu_custom_call.1} parent=0
    #allocation3 [shape = 'u8[8192]{0}', space=vmem, size = 0x2000, scoped, tag = 'output window, operand 0, single buffered']
    #allocation4 [shape = 's32[2]{0}', space=sflag, size = 0x8, scoped, tag = 'scoped memory for tpu_custom_call.1']
    %18 = vsyncpa [#allocation4], 0
    loop: start=0, step=1, limit=4
    $region2: #{tpu_custom_call.1} parent=1 // loop_pre_header
      _
    $region3: #{tpu_custom_call.1} parent=1 // loop_header
      %s20 = sphi 0, %s24
      %p21 = scmp.ge.s32.totalorder %s20, 4
      %s27 = sphi 0, %s39
      %s28 = sphi 0, %s35
      %s29 = sphi 0, %s27
      %s30 = sphi 0, %s28
      %s31 = sphi 0, %s29
      %s32 = sphi 0, %s30
      %s42 = sphi 0, %s44
      %s45 = sphi 0, %s42
      %s46 = sphi 0, %s45
      %s62 = sphi 0, %s46
      %s68 = sphi 0, %s70
      %s71 = sphi 0, %s68
      %s72 = sphi 0, %s71
      %s88 = sphi 0, %s72
      %s94 = sphi 0, %s96
      %s97 = sphi 0, %s94
      %s98 = sphi 0, %s97
      %s114 = sphi 0, %s98
      %s120 = sphi 0, %s122
      %s123 = sphi 0, %s120
      %s124 = sphi 0, %s123
      %s140 = sphi 0, %s124
      %s146 = sphi 0, %s148
      %s149 = sphi 0, %s146
      %s150 = sphi 0, %s149
      %s166 = sphi 0, %s150
      %s172 = sphi 0, %s174
      %s175 = sphi 0, %s172
      %s176 = sphi 0, %s175
      %s192 = sphi 0, %s176
      %s198 = sphi 0, %s200
      %s201 = sphi 0, %s198
      %s202 = sphi 0, %s201
      %s218 = sphi 0, %s202
      %s224 = sphi 0, %s226
      %s227 = sphi 0, %s224
      %s228 = sphi 0, %s227
      %s244 = sphi 0, %s228
      %s250 = sphi 0, %s252
      %s253 = sphi 0, %s250
      %s254 = sphi 0, %s253
      %s270 = sphi 0, %s254
      %s276 = sphi 0, %s278
      %s279 = sphi 0, %s276
      %s280 = sphi 0, %s279
      %s296 = sphi 0, %s280
      %s302 = sphi 0, %s304
      %s305 = sphi 0, %s302
      %s306 = sphi 0, %s305
      %s322 = sphi 0, %s306
      %s328 = sphi 0, %s330
      %s331 = sphi 0, %s328
      %s332 = sphi 0, %s331
      %s348 = sphi 0, %s332
      %s354 = sphi 0, %s356
      %s357 = sphi 0, %s354
      %s358 = sphi 0, %s357
      %s374 = sphi 0, %s358
      %s380 = sphi 0, %s382
      %s383 = sphi 0, %s380
      %s384 = sphi 0, %s383
      %s400 = sphi 0, %s384
    $region4: #{tpu_custom_call.1} parent=1 // loop_header_branch
      %23 = sbr.rel (%p21) target = $region8
    $region5: #{tpu_custom_call.1} parent=1 // loop_body
      %s25 = ssub.s32 %s20, 1
      %s26 = ssub.s32 %s20, 2
      %s33 = sadd.s32 1, %s28
      %p34 = scmp.ge.s32.totalorder %s33, 2
      %s35 = scalar_select %p34, 0, %s33
      %s36 = sadd.s32 1, %s27
      %s37 = scalar_select %p34, %s36, %s27
      %p38 = scmp.ge.s32.totalorder %s37, 1
      %s39 = scalar_select %p38, 0, %s37
      %s40 = ssub.s32 %s27, %s39
      %p41 = scmp.eq.s32.totalorder %s40, 0
      %s43 = sadd.s32 %s42, 1
      %s44 = scalar_select %p41, %s42, %s43
      %p47 = pneg %p41
      %p48 = scmp.eq.s32.totalorder %s20, 1
      %p49 = por %p47, %p48
      %p50 = scmp.ne.s32.totalorder %s42, %s45
      %p51 = scmp.eq.s32.totalorder %s20, 0
      %p52 = por %p50, %p51
      %p53 = scmp.ne.s32.totalorder %s42, %s45
      %p54 = scmp.eq.s32.totalorder %s25, 1
      %p55 = por %p53, %p54
      %p56 = scmp.ne.s32.totalorder %s45, %s46
      %p57 = scmp.eq.s32.totalorder %s25, 0
      %p58 = por %p56, %p57
      %p59 = scmp.ne.s32.totalorder %s45, %s46
      %p60 = scmp.eq.s32.totalorder %s26, 1
      %p61 = por %p59, %p60
      %p63 = scmp.ne.s32.totalorder %s46, %s62
      %p64 = scmp.eq.s32.totalorder %s26, 0
      %p65 = por %p63, %p64
      %s66 = ssub.s32 %s28, %s35
      %p67 = scmp.eq.s32.totalorder %s66, 0
      %s69 = sadd.s32 %s68, 1
      %s70 = scalar_select %p67, %s68, %s69
      %p73 = pneg %p67
      %p74 = scmp.eq.s32.totalorder %s20, 1
      %p75 = por %p73, %p74
      %p76 = scmp.ne.s32.totalorder %s68, %s71
      %p77 = scmp.eq.s32.totalorder %s20, 0
      %p78 = por %p76, %p77
      %p79 = scmp.ne.s32.totalorder %s68, %s71
      %p80 = scmp.eq.s32.totalorder %s25, 1
      %p81 = por %p79, %p80
      %p82 = scmp.ne.s32.totalorder %s71, %s72
      %p83 = scmp.eq.s32.totalorder %s25, 0
      %p84 = por %p82, %p83
      %p85 = scmp.ne.s32.totalorder %s71, %s72
      %p86 = scmp.eq.s32.totalorder %s26, 1
      %p87 = por %p85, %p86
      %p89 = scmp.ne.s32.totalorder %s72, %s88
      %p90 = scmp.eq.s32.totalorder %s26, 0
      %p91 = por %p89, %p90
      %s92 = ssub.s32 %s28, %s35
      %p93 = scmp.eq.s32.totalorder %s92, 0
      %s95 = sadd.s32 %s94, 1
      %s96 = scalar_select %p93, %s94, %s95
      %p99 = pneg %p93
      %p100 = scmp.eq.s32.totalorder %s20, 1
      %p101 = por %p99, %p100
      %p102 = scmp.ne.s32.totalorder %s94, %s97
      %p103 = scmp.eq.s32.totalorder %s20, 0
      %p104 = por %p102, %p103
      %p105 = scmp.ne.s32.totalorder %s94, %s97
      %p106 = scmp.eq.s32.totalorder %s25, 1
      %p107 = por %p105, %p106
      %p108 = scmp.ne.s32.totalorder %s97, %s98
      %p109 = scmp.eq.s32.totalorder %s25, 0
      %p110 = por %p108, %p109
      %p111 = scmp.ne.s32.totalorder %s97, %s98
      %p112 = scmp.eq.s32.totalorder %s26, 1
      %p113 = por %p111, %p112
      %p115 = scmp.ne.s32.totalorder %s98, %s114
      %p116 = scmp.eq.s32.totalorder %s26, 0
      %p117 = por %p115, %p116
      %s118 = ssub.s32 %s28, %s35
      %p119 = scmp.eq.s32.totalorder %s118, 0
      %s121 = sadd.s32 %s120, 1
      %s122 = scalar_select %p119, %s120, %s121
      %p125 = pneg %p119
      %p126 = scmp.eq.s32.totalorder %s20, 1
      %p127 = por %p125, %p126
      %p128 = scmp.ne.s32.totalorder %s120, %s123
      %p129 = scmp.eq.s32.totalorder %s20, 0
      %p130 = por %p128, %p129
      %p131 = scmp.ne.s32.totalorder %s120, %s123
      %p132 = scmp.eq.s32.totalorder %s25, 1
      %p133 = por %p131, %p132
      %p134 = scmp.ne.s32.totalorder %s123, %s124
      %p135 = scmp.eq.s32.totalorder %s25, 0
      %p136 = por %p134, %p135
      %p137 = scmp.ne.s32.totalorder %s123, %s124
      %p138 = scmp.eq.s32.totalorder %s26, 1
      %p139 = por %p137, %p138
      %p141 = scmp.ne.s32.totalorder %s124, %s140
      %p142 = scmp.eq.s32.totalorder %s26, 0
      %p143 = por %p141, %p142
      %s144 = ssub.s32 %s28, %s35
      %p145 = scmp.eq.s32.totalorder %s144, 0
      %s147 = sadd.s32 %s146, 1
      %s148 = scalar_select %p145, %s146, %s147
      %p151 = pneg %p145
      %p152 = scmp.eq.s32.totalorder %s20, 1
      %p153 = por %p151, %p152
      %p154 = scmp.ne.s32.totalorder %s146, %s149
      %p155 = scmp.eq.s32.totalorder %s20, 0
      %p156 = por %p154, %p155
      %p157 = scmp.ne.s32.totalorder %s146, %s149
      %p158 = scmp.eq.s32.totalorder %s25, 1
      %p159 = por %p157, %p158
      %p160 = scmp.ne.s32.totalorder %s149, %s150
      %p161 = scmp.eq.s32.totalorder %s25, 0
      %p162 = por %p160, %p161
      %p163 = scmp.ne.s32.totalorder %s149, %s150
      %p164 = scmp.eq.s32.totalorder %s26, 1
      %p165 = por %p163, %p164
      %p167 = scmp.ne.s32.totalorder %s150, %s166
      %p168 = scmp.eq.s32.totalorder %s26, 0
      %p169 = por %p167, %p168
      %s170 = ssub.s32 %s28, %s35
      %p171 = scmp.eq.s32.totalorder %s170, 0
      %s173 = sadd.s32 %s172, 1
      %s174 = scalar_select %p171, %s172, %s173
      %p177 = pneg %p171
      %p178 = scmp.eq.s32.totalorder %s20, 1
      %p179 = por %p177, %p178
      %p180 = scmp.ne.s32.totalorder %s172, %s175
      %p181 = scmp.eq.s32.totalorder %s20, 0
      %p182 = por %p180, %p181
      %p183 = scmp.ne.s32.totalorder %s172, %s175
      %p184 = scmp.eq.s32.totalorder %s25, 1
      %p185 = por %p183, %p184
      %p186 = scmp.ne.s32.totalorder %s175, %s176
      %p187 = scmp.eq.s32.totalorder %s25, 0
      %p188 = por %p186, %p187
      %p189 = scmp.ne.s32.totalorder %s175, %s176
      %p190 = scmp.eq.s32.totalorder %s26, 1
      %p191 = por %p189, %p190
      %p193 = scmp.ne.s32.totalorder %s176, %s192
      %p194 = scmp.eq.s32.totalorder %s26, 0
      %p195 = por %p193, %p194
      %s196 = ssub.s32 %s28, %s35
      %p197 = scmp.eq.s32.totalorder %s196, 0
      %s199 = sadd.s32 %s198, 1
      %s200 = scalar_select %p197, %s198, %s199
      %p203 = pneg %p197
      %p204 = scmp.eq.s32.totalorder %s20, 1
      %p205 = por %p203, %p204
      %p206 = scmp.ne.s32.totalorder %s198, %s201
      %p207 = scmp.eq.s32.totalorder %s20, 0
      %p208 = por %p206, %p207
      %p209 = scmp.ne.s32.totalorder %s198, %s201
      %p210 = scmp.eq.s32.totalorder %s25, 1
      %p211 = por %p209, %p210
      %p212 = scmp.ne.s32.totalorder %s201, %s202
      %p213 = scmp.eq.s32.totalorder %s25, 0
      %p214 = por %p212, %p213
      %p215 = scmp.ne.s32.totalorder %s201, %s202
      %p216 = scmp.eq.s32.totalorder %s26, 1
      %p217 = por %p215, %p216
      %p219 = scmp.ne.s32.totalorder %s202, %s218
      %p220 = scmp.eq.s32.totalorder %s26, 0
      %p221 = por %p219, %p220
      %s222 = ssub.s32 %s28, %s35
      %p223 = scmp.eq.s32.totalorder %s222, 0
      %s225 = sadd.s32 %s224, 1
      %s226 = scalar_select %p223, %s224, %s225
      %p229 = pneg %p223
      %p230 = scmp.eq.s32.totalorder %s20, 1
      %p231 = por %p229, %p230
      %p232 = scmp.ne.s32.totalorder %s224, %s227
      %p233 = scmp.eq.s32.totalorder %s20, 0
      %p234 = por %p232, %p233
      %p235 = scmp.ne.s32.totalorder %s224, %s227
      %p236 = scmp.eq.s32.totalorder %s25, 1
      %p237 = por %p235, %p236
      %p238 = scmp.ne.s32.totalorder %s227, %s228
      %p239 = scmp.eq.s32.totalorder %s25, 0
      %p240 = por %p238, %p239
      %p241 = scmp.ne.s32.totalorder %s227, %s228
      %p242 = scmp.eq.s32.totalorder %s26, 1
      %p243 = por %p241, %p242
      %p245 = scmp.ne.s32.totalorder %s228, %s244
      %p246 = scmp.eq.s32.totalorder %s26, 0
      %p247 = por %p245, %p246
      %s248 = ssub.s32 %s28, %s35
      %p249 = scmp.eq.s32.totalorder %s248, 0
      %s251 = sadd.s32 %s250, 1
      %s252 = scalar_select %p249, %s250, %s251
      %p255 = pneg %p249
      %p256 = scmp.eq.s32.totalorder %s20, 1
      %p257 = por %p255, %p256
      %p258 = scmp.ne.s32.totalorder %s250, %s253
      %p259 = scmp.eq.s32.totalorder %s20, 0
      %p260 = por %p258, %p259
      %p261 = scmp.ne.s32.totalorder %s250, %s253
      %p262 = scmp.eq.s32.totalorder %s25, 1
      %p263 = por %p261, %p262
      %p264 = scmp.ne.s32.totalorder %s253, %s254
      %p265 = scmp.eq.s32.totalorder %s25, 0
      %p266 = por %p264, %p265
      %p267 = scmp.ne.s32.totalorder %s253, %s254
      %p268 = scmp.eq.s32.totalorder %s26, 1
      %p269 = por %p267, %p268
      %p271 = scmp.ne.s32.totalorder %s254, %s270
      %p272 = scmp.eq.s32.totalorder %s26, 0
      %p273 = por %p271, %p272
      %s274 = ssub.s32 %s28, %s35
      %p275 = scmp.eq.s32.totalorder %s274, 0
      %s277 = sadd.s32 %s276, 1
      %s278 = scalar_select %p275, %s276, %s277
      %p281 = pneg %p275
      %p282 = scmp.eq.s32.totalorder %s20, 1
      %p283 = por %p281, %p282
      %p284 = scmp.ne.s32.totalorder %s276, %s279
      %p285 = scmp.eq.s32.totalorder %s20, 0
      %p286 = por %p284, %p285
      %p287 = scmp.ne.s32.totalorder %s276, %s279
      %p288 = scmp.eq.s32.totalorder %s25, 1
      %p289 = por %p287, %p288
      %p290 = scmp.ne.s32.totalorder %s279, %s280
      %p291 = scmp.eq.s32.totalorder %s25, 0
      %p292 = por %p290, %p291
      %p293 = scmp.ne.s32.totalorder %s279, %s280
      %p294 = scmp.eq.s32.totalorder %s26, 1
      %p295 = por %p293, %p294
      %p297 = scmp.ne.s32.totalorder %s280, %s296
      %p298 = scmp.eq.s32.totalorder %s26, 0
      %p299 = por %p297, %p298
      %s300 = ssub.s32 %s28, %s35
      %p301 = scmp.eq.s32.totalorder %s300, 0
      %s303 = sadd.s32 %s302, 1
      %s304 = scalar_select %p301, %s302, %s303
      %p307 = pneg %p301
      %p308 = scmp.eq.s32.totalorder %s20, 1
      %p309 = por %p307, %p308
      %p310 = scmp.ne.s32.totalorder %s302, %s305
      %p311 = scmp.eq.s32.totalorder %s20, 0
      %p312 = por %p310, %p311
      %p313 = scmp.ne.s32.totalorder %s302, %s305
      %p314 = scmp.eq.s32.totalorder %s25, 1
      %p315 = por %p313, %p314
      %p316 = scmp.ne.s32.totalorder %s305, %s306
      %p317 = scmp.eq.s32.totalorder %s25, 0
      %p318 = por %p316, %p317
      %p319 = scmp.ne.s32.totalorder %s305, %s306
      %p320 = scmp.eq.s32.totalorder %s26, 1
      %p321 = por %p319, %p320
      %p323 = scmp.ne.s32.totalorder %s306, %s322
      %p324 = scmp.eq.s32.totalorder %s26, 0
      %p325 = por %p323, %p324
      %s326 = ssub.s32 %s28, %s35
      %p327 = scmp.eq.s32.totalorder %s326, 0
      %s329 = sadd.s32 %s328, 1
      %s330 = scalar_select %p327, %s328, %s329
      %p333 = pneg %p327
      %p334 = scmp.eq.s32.totalorder %s20, 1
      %p335 = por %p333, %p334
      %p336 = scmp.ne.s32.totalorder %s328, %s331
      %p337 = scmp.eq.s32.totalorder %s20, 0
      %p338 = por %p336, %p337
      %p339 = scmp.ne.s32.totalorder %s328, %s331
      %p340 = scmp.eq.s32.totalorder %s25, 1
      %p341 = por %p339, %p340
      %p342 = scmp.ne.s32.totalorder %s331, %s332
      %p343 = scmp.eq.s32.totalorder %s25, 0
      %p344 = por %p342, %p343
      %p345 = scmp.ne.s32.totalorder %s331, %s332
      %p346 = scmp.eq.s32.totalorder %s26, 1
      %p347 = por %p345, %p346
      %p349 = scmp.ne.s32.totalorder %s332, %s348
      %p350 = scmp.eq.s32.totalorder %s26, 0
      %p351 = por %p349, %p350
      %s352 = ssub.s32 %s28, %s35
      %p353 = scmp.eq.s32.totalorder %s352, 0
      %s355 = sadd.s32 %s354, 1
      %s356 = scalar_select %p353, %s354, %s355
      %p359 = pneg %p353
      %p360 = scmp.eq.s32.totalorder %s20, 1
      %p361 = por %p359, %p360
      %p362 = scmp.ne.s32.totalorder %s354, %s357
      %p363 = scmp.eq.s32.totalorder %s20, 0
      %p364 = por %p362, %p363
      %p365 = scmp.ne.s32.totalorder %s354, %s357
      %p366 = scmp.eq.s32.totalorder %s25, 1
      %p367 = por %p365, %p366
      %p368 = scmp.ne.s32.totalorder %s357, %s358
      %p369 = scmp.eq.s32.totalorder %s25, 0
      %p370 = por %p368, %p369
      %p371 = scmp.ne.s32.totalorder %s357, %s358
      %p372 = scmp.eq.s32.totalorder %s26, 1
      %p373 = por %p371, %p372
      %p375 = scmp.ne.s32.totalorder %s358, %s374
      %p376 = scmp.eq.s32.totalorder %s26, 0
      %p377 = por %p375, %p376
      %s378 = ssub.s32 %s27, %s39
      %p379 = scmp.eq.s32.totalorder %s378, 0
      %s381 = sadd.s32 %s380, 1
      %s382 = scalar_select %p379, %s380, %s381
      %p385 = pneg %p379
      %p386 = scmp.eq.s32.totalorder %s20, 1
      %p387 = por %p385, %p386
      %p388 = scmp.ne.s32.totalorder %s380, %s383
      %p389 = scmp.eq.s32.totalorder %s20, 0
      %p390 = por %p388, %p389
      %p391 = scmp.ne.s32.totalorder %s380, %s383
      %p392 = scmp.eq.s32.totalorder %s25, 1
      %p393 = por %p391, %p392
      %p394 = scmp.ne.s32.totalorder %s383, %s384
      %p395 = scmp.eq.s32.totalorder %s25, 0
      %p396 = por %p394, %p395
      %p397 = scmp.ne.s32.totalorder %s383, %s384
      %p398 = scmp.eq.s32.totalorder %s26, 1
      %p399 = por %p397, %p398
      %p401 = scmp.ne.s32.totalorder %s384, %s400
      %p402 = scmp.eq.s32.totalorder %s26, 0
      %p403 = por %p401, %p402
      %p404 = scmp.le.s32.totalorder 1, %s20
      %p405 = scmp.lt.s32.totalorder %s20, 3
      %p406 = pnand %p404, %p405
      %p407 = pneg %p406
      // Predicated region
      $region9: #{tpu_custom_call.1} parent=5 // pred_check
        _
      $region10: #{tpu_custom_call.1} parent=5 // pred_check_branch
        %409 = sbr.rel (%p406) target = $region12
      $region11: #{tpu_custom_call.1} parent=5 // pred_region
        %s410 = ssub.s32 %s20, 1
        // Predicated region
        $region13: #{tpu_custom_call.1} parent=11 // pred_check
          %p411 = pneg %p58
        $region14: #{tpu_custom_call.1} parent=11 // pred_check_branch
          %413 = sbr.rel (%p411) target = $region16
        $region15: #{tpu_custom_call.1} parent=11 // pred_region
          %s414 = smul.u32 2, %s29
          %p415 = scmp.lt.s32.totalorder %s414, 1
          %s416 = scalar_select %p415, %s414, 1
          %s417 = smul.addr %s416, 8
          %s418 = scalar_lea.vmem %s0, %s417
          %s419 = smul.u32 2, %s29
        $region16: #{tpu_custom_call.1} parent=11 // pred_fallthru
          _
      $region12: #{tpu_custom_call.1} parent=5 // pred_fallthru
        _
      %p420 = scmp.lt.s32.totalorder %s20, 2
      // Predicated region
      $region17: #{tpu_custom_call.1} parent=5 // pred_check
        %p421 = pneg %p420
      $region18: #{tpu_custom_call.1} parent=5 // pred_check_branch
        %423 = sbr.rel (%p421) target = $region20
      $region19: #{tpu_custom_call.1} parent=5 // pred_region
        // Predicated region
        $region21: #{tpu_custom_call.1} parent=19 // pred_check
          %p424 = pneg %p78
        $region22: #{tpu_custom_call.1} parent=19 // pred_check_branch
          %426 = sbr.rel (%p424) target = $region24
        $region23: #{tpu_custom_call.1} parent=19 // pred_region
          %p427 = scmp.lt.s32.totalorder %s28, 1
          %s428 = scalar_select %p427, %s28, 1
          %s429 = scalar_lea.vmem %s1, %s428
        $region24: #{tpu_custom_call.1} parent=19 // pred_fallthru
          _
        // Predicated region
        $region25: #{tpu_custom_call.1} parent=19 // pred_check
          %p430 = pneg %p104
        $region26: #{tpu_custom_call.1} parent=19 // pred_check_branch
          %432 = sbr.rel (%p430) target = $region28
        $region27: #{tpu_custom_call.1} parent=19 // pred_region
          %p433 = scmp.lt.s32.totalorder %s28, 1
          %s434 = scalar_select %p433, %s28, 1
          %s435 = scalar_lea.vmem %s2, %s434
        $region28: #{tpu_custom_call.1} parent=19 // pred_fallthru
          _
        // Predicated region
        $region29: #{tpu_custom_call.1} parent=19 // pred_check
          %p436 = pneg %p130
        $region30: #{tpu_custom_call.1} parent=19 // pred_check_branch
          %438 = sbr.rel (%p436) target = $region32
        $region31: #{tpu_custom_call.1} parent=19 // pred_region
          %p439 = scmp.lt.s32.totalorder %s28, 1
          %s440 = scalar_select %p439, %s28, 1
          %s441 = smul.addr %s440, 4
          %s442 = smul.addr %s441, 4
          %s443 = scalar_lea.vmem %s3, %s442
        $region32: #{tpu_custom_call.1} parent=19 // pred_fallthru
          _
        // Predicated region
        $region33: #{tpu_custom_call.1} parent=19 // pred_check
          %p444 = pneg %p156
        $region34: #{tpu_custom_call.1} parent=19 // pred_check_branch
          %446 = sbr.rel (%p444) target = $region36
        $region35: #{tpu_custom_call.1} parent=19 // pred_region
          %p447 = scmp.lt.s32.totalorder %s28, 1
          %s448 = scalar_select %p447, %s28, 1
          %s449 = scalar_lea.vmem %s4, %s448
        $region36: #{tpu_custom_call.1} parent=19 // pred_fallthru
          _
        // Predicated region
        $region37: #{tpu_custom_call.1} parent=19 // pred_check
          %p450 = pneg %p182
        $region38: #{tpu_custom_call.1} parent=19 // pred_check_branch
          %452 = sbr.rel (%p450) target = $region40
        $region39: #{tpu_custom_call.1} parent=19 // pred_region
          %p453 = scmp.lt.s32.totalorder %s28, 1
          %s454 = scalar_select %p453, %s28, 1
          %s455 = smul.addr %s454, 4
          %s456 = smul.addr %s455, 4
          %s457 = scalar_lea.vmem %s5, %s456
        $region40: #{tpu_custom_call.1} parent=19 // pred_fallthru
          _
        // Predicated region
        $region41: #{tpu_custom_call.1} parent=19 // pred_check
          %p458 = pneg %p208
        $region42: #{tpu_custom_call.1} parent=19 // pred_check_branch
          %460 = sbr.rel (%p458) target = $region44
        $region43: #{tpu_custom_call.1} parent=19 // pred_region
          %p461 = scmp.lt.s32.totalorder %s28, 1
          %s462 = scalar_select %p461, %s28, 1
          %s463 = scalar_lea.vmem %s6, %s462
        $region44: #{tpu_custom_call.1} parent=19 // pred_fallthru
          _
        // Predicated region
        $region45: #{tpu_custom_call.1} parent=19 // pred_check
          %p464 = pneg %p234
        $region46: #{tpu_custom_call.1} parent=19 // pred_check_branch
          %466 = sbr.rel (%p464) target = $region48
        $region47: #{tpu_custom_call.1} parent=19 // pred_region
          %p467 = scmp.lt.s32.totalorder %s28, 1
          %s468 = scalar_select %p467, %s28, 1
          %s469 = scalar_lea.vmem %s7, %s468
        $region48: #{tpu_custom_call.1} parent=19 // pred_fallthru
          _
        // Predicated region
        $region49: #{tpu_custom_call.1} parent=19 // pred_check
          %p470 = pneg %p260
        $region50: #{tpu_custom_call.1} parent=19 // pred_check_branch
          %472 = sbr.rel (%p470) target = $region52
        $region51: #{tpu_custom_call.1} parent=19 // pred_region
          %p473 = scmp.lt.s32.totalorder %s28, 1
          %s474 = scalar_select %p473, %s28, 1
          %s475 = scalar_lea.vmem %s8, %s474
        $region52: #{tpu_custom_call.1} parent=19 // pred_fallthru
          _
        // Predicated region
        $region53: #{tpu_custom_call.1} parent=19 // pred_check
          %p476 = pneg %p286
        $region54: #{tpu_custom_call.1} parent=19 // pred_check_branch
          %478 = sbr.rel (%p476) target = $region56
        $region55: #{tpu_custom_call.1} parent=19 // pred_region
          %p479 = scmp.lt.s32.totalorder %s28, 1
          %s480 = scalar_select %p479, %s28, 1
          %s481 = smul.addr %s480, 4
          %s482 = smul.addr %s481, 4
          %s483 = scalar_lea.vmem %s9, %s482
        $region56: #{tpu_custom_call.1} parent=19 // pred_fallthru
          _
        // Predicated region
        $region57: #{tpu_custom_call.1} parent=19 // pred_check
          %p484 = pneg %p312
        $region58: #{tpu_custom_call.1} parent=19 // pred_check_branch
          %486 = sbr.rel (%p484) target = $region60
        $region59: #{tpu_custom_call.1} parent=19 // pred_region
          %p487 = scmp.lt.s32.totalorder %s28, 1
          %s488 = scalar_select %p487, %s28, 1
          %s489 = scalar_lea.vmem %s10, %s488
        $region60: #{tpu_custom_call.1} parent=19 // pred_fallthru
          _
        // Predicated region
        $region61: #{tpu_custom_call.1} parent=19 // pred_check
          %p490 = pneg %p338
        $region62: #{tpu_custom_call.1} parent=19 // pred_check_branch
          %492 = sbr.rel (%p490) target = $region64
        $region63: #{tpu_custom_call.1} parent=19 // pred_region
          %p493 = scmp.lt.s32.totalorder %s28, 1
          %s494 = scalar_select %p493, %s28, 1
          %s495 = smul.addr %s494, 16
          %s496 = smul.addr %s495, 4
          %s497 = scalar_lea.vmem %s11, %s496
        $region64: #{tpu_custom_call.1} parent=19 // pred_fallthru
          _
        // Predicated region
        $region65: #{tpu_custom_call.1} parent=19 // pred_check
          %p498 = pneg %p364
        $region66: #{tpu_custom_call.1} parent=19 // pred_check_branch
          %500 = sbr.rel (%p498) target = $region68
        $region67: #{tpu_custom_call.1} parent=19 // pred_region
          %p501 = scmp.lt.s32.totalorder %s28, 1
          %s502 = scalar_select %p501, %s28, 1
          %s503 = scalar_lea.vmem %s12, %s502
        $region68: #{tpu_custom_call.1} parent=19 // pred_fallthru
          _
      $region20: #{tpu_custom_call.1} parent=5 // pred_fallthru
        _
      %p504 = scmp.le.s32.totalorder 1, %s20
      %p505 = scmp.lt.s32.totalorder %s20, 3
      %p506 = pnand %p504, %p505
      %p507 = pneg %p506
      // Predicated region
      $region69: #{tpu_custom_call.1} parent=5 // pred_check
        _
      $region70: #{tpu_custom_call.1} parent=5 // pred_check_branch
        %509 = sbr.rel (%p506) target = $region72
      $region71: #{tpu_custom_call.1} parent=5 // pred_region
        %s510 = ssub.s32 %s20, 1
        %s511 = smul.u32 2, %s29
        %p512 = scmp.lt.s32.totalorder %s511, 1
        %s513 = scalar_select %p512, %s511, 1
        %s514 = smul.addr %s513, 8
        %s515 = scalar_lea.vmem %s0, %s514
        %p516 = pneg %p58
        %p517 = pneg %p55
        %p518 = scmp.lt.s32.totalorder %s30, 1
        %s519 = scalar_select %p518, %s30, 1
        %s520 = scalar_lea.vmem %s1, %s519
        %p521 = pneg %p84
        %p522 = pneg %p81
        %p523 = scmp.lt.s32.totalorder %s30, 1
        %s524 = scalar_select %p523, %s30, 1
        %s525 = scalar_lea.vmem %s2, %s524
        %p526 = pneg %p110
        %p527 = pneg %p107
        %p528 = scmp.lt.s32.totalorder %s30, 1
        %s529 = scalar_select %p528, %s30, 1
        %s530 = smul.addr %s529, 4
        %s531 = smul.addr %s530, 4
        %s532 = scalar_lea.vmem %s3, %s531
        %p533 = pneg %p136
        %p534 = pneg %p133
        %p535 = scmp.lt.s32.totalorder %s30, 1
        %s536 = scalar_select %p535, %s30, 1
        %s537 = scalar_lea.vmem %s4, %s536
        %p538 = pneg %p162
        %p539 = pneg %p159
        %p540 = scmp.lt.s32.totalorder %s30, 1
        %s541 = scalar_select %p540, %s30, 1
        %s542 = smul.addr %s541, 4
        %s543 = smul.addr %s542, 4
        %s544 = scalar_lea.vmem %s5, %s543
        %p545 = pneg %p188
        %p546 = pneg %p185
        %p547 = scmp.lt.s32.totalorder %s30, 1
        %s548 = scalar_select %p547, %s30, 1
        %s549 = scalar_lea.vmem %s6, %s548
        %p550 = pneg %p214
        %p551 = pneg %p211
        %p552 = scmp.lt.s32.totalorder %s30, 1
        %s553 = scalar_select %p552, %s30, 1
        %s554 = scalar_lea.vmem %s7, %s553
        %p555 = pneg %p240
        %p556 = pneg %p237
        %p557 = scmp.lt.s32.totalorder %s30, 1
        %s558 = scalar_select %p557, %s30, 1
        %s559 = scalar_lea.vmem %s8, %s558
        %p560 = pneg %p266
        %p561 = pneg %p263
        %p562 = scmp.lt.s32.totalorder %s30, 1
        %s563 = scalar_select %p562, %s30, 1
        %s564 = smul.addr %s563, 4
        %s565 = smul.addr %s564, 4
        %s566 = scalar_lea.vmem %s9, %s565
        %p567 = pneg %p292
        %p568 = pneg %p289
        %p569 = scmp.lt.s32.totalorder %s30, 1
        %s570 = scalar_select %p569, %s30, 1
        %s571 = scalar_lea.vmem %s10, %s570
        %p572 = pneg %p318
        %p573 = pneg %p315
        %p574 = scmp.lt.s32.totalorder %s30, 1
        %s575 = scalar_select %p574, %s30, 1
        %s576 = smul.addr %s575, 16
        %s577 = smul.addr %s576, 4
        %s578 = scalar_lea.vmem %s11, %s577
        %p579 = pneg %p344
        %p580 = pneg %p341
        %p581 = scmp.lt.s32.totalorder %s30, 1
        %s582 = scalar_select %p581, %s30, 1
        %s583 = scalar_lea.vmem %s12, %s582
        %p584 = pneg %p370
        %p585 = pneg %p367
        %p586 = pneg %p396
        %p587 = pneg %p393
        %s588 = smul.u32 2, %s29
        %p589 = scmp.lt.s32.totalorder %s588, 1
        %s590 = scalar_select %p589, %s588, 1
        %s591 = smul.addr %s590, 8
        %s592 = scalar_lea.vmem %s0, %s591
        %s593 = smul.u32 2, %s29
        %p594 = scmp.lt.s32.totalorder %s30, 1
        %s595 = scalar_select %p594, %s30, 1
        %s596 = scalar_lea.vmem %s1, %s595
        %p597 = scmp.lt.s32.totalorder %s30, 1
        %s598 = scalar_select %p597, %s30, 1
        %s599 = scalar_lea.vmem %s2, %s598
        %p600 = scmp.lt.s32.totalorder %s30, 1
        %s601 = scalar_select %p600, %s30, 1
        %s602 = smul.addr %s601, 4
        %s603 = smul.addr %s602, 4
        %s604 = scalar_lea.vmem %s3, %s603
        %p605 = scmp.lt.s32.totalorder %s30, 1
        %s606 = scalar_select %p605, %s30, 1
        %s607 = scalar_lea.vmem %s4, %s606
        %p608 = scmp.lt.s32.totalorder %s30, 1
        %s609 = scalar_select %p608, %s30, 1
        %s610 = smul.addr %s609, 4
        %s611 = smul.addr %s610, 4
        %s612 = scalar_lea.vmem %s5, %s611
        %p613 = scmp.lt.s32.totalorder %s30, 1
        %s614 = scalar_select %p613, %s30, 1
        %s615 = scalar_lea.vmem %s6, %s614
        %p616 = scmp.lt.s32.totalorder %s30, 1
        %s617 = scalar_select %p616, %s30, 1
        %s618 = scalar_lea.vmem %s7, %s617
        %p619 = scmp.lt.s32.totalorder %s30, 1
        %s620 = scalar_select %p619, %s30, 1
        %s621 = scalar_lea.vmem %s8, %s620
        %p622 = scmp.lt.s32.totalorder %s30, 1
        %s623 = scalar_select %p622, %s30, 1
        %s624 = smul.addr %s623, 4
        %s625 = smul.addr %s624, 4
        %s626 = scalar_lea.vmem %s9, %s625
        %p627 = scmp.lt.s32.totalorder %s30, 1
        %s628 = scalar_select %p627, %s30, 1
        %s629 = scalar_lea.vmem %s10, %s628
        %p630 = scmp.lt.s32.totalorder %s30, 1
        %s631 = scalar_select %p630, %s30, 1
        %s632 = smul.addr %s631, 16
        %s633 = smul.addr %s632, 4
        %s634 = scalar_lea.vmem %s11, %s633
        %p635 = scmp.lt.s32.totalorder %s30, 1
        %s636 = scalar_select %p635, %s30, 1
        %s637 = scalar_lea.vmem %s12, %s636
        %s638 = smul.u32 2, %s29
        %p640 = scmp.eq.s32.totalorder %s30, 0
        // Predicated region
        $region73: #{tpu_custom_call.1} parent=71 // pred_check
          %p641 = pneg %p640
        $region74: #{tpu_custom_call.1} parent=71 // pred_check_branch
          %643 = sbr.rel (%p641) target = $region76
        $region75: #{tpu_custom_call.1} parent=71 // pred_region
          %v644 = vld [vmem:[%s592] sm:$0xff]
          %v645 = vld [vmem:[%s592 + $0x8] sm:$0xff]
          %vm646 = vcmask 261120
          %647 = vst.msk [vmem:[#allocation2] sm:$0xff] %vm646, %v644
          %648 = vst.msk [vmem:[#allocation2 + $0x8] sm:$0xff] %vm646, %v645
        $region76: #{tpu_custom_call.1} parent=71 // pred_fallthru
          _
        %v649 = vld [vmem:[#allocation2] sm:$0xff]
        %v650 = vld [vmem:[#allocation2 + $0x8] sm:$0xff]
        %v651 = vld [vmem:[%s596] sm:$0x1]
        %v652 = vld [vmem:[%s599] sm:$0x1]
        %vm653 = vcmask 261120
        %v654 = vsel %vm653, %v649, 0.0
        %655 = vadd.xlane.f32.xlu0 %v654
        %v656 = vpop.xlane.xlu0 %655
        %v657 = vsel %vm653, %v650, 0.0
        %658 = vadd.xlane.f32.xlu0 %v657
        %v659 = vpop.xlane.xlu0 %658
        %v660 = vrcp.pop 32.0
        %v661 = vmul.f32 %v656, %v660
        %v662 = vmul.f32 %v659, %v660
        %v663 = vsub.f32 %v649, %v661
        %v664 = vsub.f32 %v650, %v662
        %v665 = vmul.f32 %v663, %v663
        %v666 = vmul.f32 %v664, %v664
        %v667 = vsel %vm653, %v665, 0.0
        %668 = vadd.xlane.f32.xlu0 %v667
        %v669 = vpop.xlane.xlu0 %668
        %v670 = vsel %vm653, %v666, 0.0
        %671 = vadd.xlane.f32.xlu0 %v670
        %v672 = vpop.xlane.xlu0 %671
        %v673 = vmul.f32 %v669, %v660
        %v674 = vmul.f32 %v672, %v660
        %v675 = vadd.f32 %v673, 1e-05
        %v676 = vadd.f32 %v674, 1e-05
        %v677 = vrsqrt.pop %v675
        %v678 = vrsqrt.pop %v676
        %v679 = vmul.f32 %v663, %v677
        %v680 = vmul.f32 %v664, %v678
        %v682 = vlaneseq
        %v683 = vshrl.u32 %v682, 7
        %v684 = vsub.s32 0, %v683
        %v685 = vrot.slane %v651, %v684
        %v687 = vmul.f32 %v679, %v685
        %v688 = vmul.f32 %v680, %v685
        %v690 = vlaneseq
        %v691 = vshrl.u32 %v690, 7
        %v692 = vsub.s32 0, %v691
        %v693 = vrot.slane %v652, %v692
        %v695 = vadd.f32 %v687, %v693
        %v696 = vadd.f32 %v688, %v693
        %v697 = vpack.c.bf16 %v696, %v695
        %v698 = vld [vmem:[%s604] sm:$0xf]
        %v699 = vld [vmem:[%s604 + $0x4] sm:$0xf]
        %v700 = vld [vmem:[%s604 + $0x8] sm:$0xf]
        %v701 = vld [vmem:[%s604 + $0xc] sm:$0xf]
        %v702 = vld [vmem:[%s607] sm:$0x1]
        %v704 = vlaneseq
        %v705 = vshrl.u32 %v704, 7
        %v706 = vsub.s32 0, %v705
        %v707 = vrot.slane %v702, %v706
        %v713 = vunpack.c.l.b16 %v698
        %v714 = vunpack.c.l.b16 %v699
        %v715 = vunpack.c.l.b16 %v700
        %v716 = vunpack.c.l.b16 %v701
        %v717 = vpack.c.b16 %v714, %v713
        %v718 = vpack.c.b16 %v716, %v715
        %v722 = vsel %vm653, %v697, 0
        %724 = vmatprep.subr.bf16.mxu0 0
        %725 = vmatpush1.bf16.msra.mxu0 %v717
        %726 = vmatprep.subr.bf16.mxu0 0
        %727 = vmatpush1.bf16.msra.mxu0 %v718
        %728 = vmatprep.subr.bf16.mxu0 0
        %729 = vmatpush1.bf16.msra.mxu0 0
        %730 = vmatprep.subr.bf16.mxu0 0
        %731 = vmatpush1.bf16.msra.mxu0 0
        %732 = vmatprep.subr.bf16.mxu0 0
        %733 = vmatpush1.bf16.msra.mxu0 0
        %734 = vmatprep.subr.bf16.mxu0 0
        %735 = vmatpush1.bf16.msra.mxu0 0
        %736 = vmatprep.subr.bf16.mxu0 0
        %737 = vmatpush1.bf16.msra.mxu0 0
        %738 = vmatprep.subr.bf16.mxu0 0
        %739 = vmatpush1.bf16.msra.mxu0 0
        %740 = vmatprep.subr.bf16.mxu0 0
        %741 = vmatpush1.bf16.msra.mxu0 0
        %742 = vmatprep.subr.bf16.mxu0 0
        %743 = vmatpush1.bf16.msra.mxu0 0
        %744 = vmatprep.subr.bf16.mxu0 0
        %745 = vmatpush1.bf16.msra.mxu0 0
        %746 = vmatprep.subr.bf16.mxu0 0
        %747 = vmatpush1.bf16.msra.mxu0 0
        %748 = vmatprep.subr.bf16.mxu0 0
        %749 = vmatpush1.bf16.msra.mxu0 0
        %750 = vmatprep.subr.bf16.mxu0 0
        %751 = vmatpush1.bf16.msra.mxu0 0
        %752 = vmatprep.subr.bf16.mxu0 0
        %753 = vmatpush1.bf16.msra.mxu0 0
        %754 = vmatprep.subr.bf16.mxu0 0
        %755 = vmatpush1.bf16.msra.mxu0 0
        %756 = vmatprep.mubr.bf16.mxu0 0
        %757 = vmatmul.mubr.bf16.gmra.mrb[0].mxu0 %v722
        %v758 = vpop.f32.mrb[0].mxu0
        %v759 = vadd.f32 %v707, %v758
        %v760 = vpop.f32.mrb[0].mxu0
        %v761 = vpop.f32.mrb[0].mxu0
        %v762 = vadd.f32 %v707, %v761
        %v763 = vpop.f32.mrb[0].mxu0
        %764 = vdwg.mxu0
        %v765 = vmul.f32 %v759, 0.35355338
        %v766 = vmul.f32 %v762, 0.35355338
        %v767 = vpack.c.bf16 %v765, %v765
        %v768 = vpack.c.bf16 %v766, %v766
        %v769 = vpack.c.bf16 %v759, %v759
        %v770 = vpack.c.bf16 %v762, %v762
        %772 = vrot.lane.b32.xlu0 %v769, 96
        %v773 = vpop.permute.xlu0 %772
        %vm774 = vcmask 64512
        %v776 = vsel %vm774, %v767, 0
        %v779 = vsel %vm774, %v773, 0
        %781 = vmatprep.subr.bf16.mxu0 0
        %782 = vmatpush1.bf16.xpose.msra.mxu0 %v779
        %783 = vmatprep.subr.bf16.mxu0 0
        %784 = vmatpush1.bf16.xpose.msra.mxu0 0
        %785 = vmatprep.subr.bf16.mxu0 0
        %786 = vmatpush1.bf16.xpose.msra.mxu0 0
        %787 = vmatprep.subr.bf16.mxu0 0
        %788 = vmatpush1.bf16.xpose.msra.mxu0 0
        %789 = vmatprep.subr.bf16.mxu0 0
        %790 = vmatpush1.bf16.xpose.msra.mxu0 0
        %791 = vmatprep.subr.bf16.mxu0 0
        %792 = vmatpush1.bf16.xpose.msra.mxu0 0
        %793 = vmatprep.subr.bf16.mxu0 0
        %794 = vmatpush1.bf16.xpose.msra.mxu0 0
        %795 = vmatprep.subr.bf16.mxu0 0
        %796 = vmatpush1.bf16.xpose.msra.mxu0 0
        %797 = vmatprep.subr.bf16.mxu0 0
        %798 = vmatpush1.bf16.xpose.msra.mxu0 0
        %799 = vmatprep.subr.bf16.mxu0 0
        %800 = vmatpush1.bf16.xpose.msra.mxu0 0
        %801 = vmatprep.subr.bf16.mxu0 0
        %802 = vmatpush1.bf16.xpose.msra.mxu0 0
        %803 = vmatprep.subr.bf16.mxu0 0
        %804 = vmatpush1.bf16.xpose.msra.mxu0 0
        %805 = vmatprep.subr.bf16.mxu0 0
        %806 = vmatpush1.bf16.xpose.msra.mxu0 0
        %807 = vmatprep.subr.bf16.mxu0 0
        %808 = vmatpush1.bf16.xpose.msra.mxu0 0
        %809 = vmatprep.subr.bf16.mxu0 0
        %810 = vmatpush1.bf16.xpose.msra.mxu0 0
        %811 = vmatprep.subr.bf16.mxu0 0
        %812 = vmatpush1.bf16.xpose.msra.mxu0 0
        %813 = vmatprep.mubr.bf16.mxu0 0
        %814 = vmatmul.mubr.bf16.gmra.mrb[0].mxu0 %v776
        %v815 = vpop.f32.mrb[0].mxu0
        %v816 = vadd.f32 0.0, %v815
        %v817 = vpop.f32.mrb[0].mxu0
        %v818 = vpop.f32.mrb[0].mxu0
        %v819 = vpop.f32.mrb[0].mxu0
        %820 = vdwg.mxu0
        %822 = vrot.lane.b32.xlu0 %v770, 96
        %v823 = vpop.permute.xlu0 %822
        %v825 = vsel %vm774, %v768, 0
        %v828 = vsel %vm774, %v823, 0
        %830 = vmatprep.subr.bf16.mxu0 0
        %831 = vmatpush1.bf16.xpose.msra.mxu0 %v828
        %832 = vmatprep.subr.bf16.mxu0 0
        %833 = vmatpush1.bf16.xpose.msra.mxu0 0
        %834 = vmatprep.subr.bf16.mxu0 0
        %835 = vmatpush1.bf16.xpose.msra.mxu0 0
        %836 = vmatprep.subr.bf16.mxu0 0
        %837 = vmatpush1.bf16.xpose.msra.mxu0 0
        %838 = vmatprep.subr.bf16.mxu0 0
        %839 = vmatpush1.bf16.xpose.msra.mxu0 0
        %840 = vmatprep.subr.bf16.mxu0 0
        %841 = vmatpush1.bf16.xpose.msra.mxu0 0
        %842 = vmatprep.subr.bf16.mxu0 0
        %843 = vmatpush1.bf16.xpose.msra.mxu0 0
        %844 = vmatprep.subr.bf16.mxu0 0
        %845 = vmatpush1.bf16.xpose.msra.mxu0 0
        %846 = vmatprep.subr.bf16.mxu0 0
        %847 = vmatpush1.bf16.xpose.msra.mxu0 0
        %848 = vmatprep.subr.bf16.mxu0 0
        %849 = vmatpush1.bf16.xpose.msra.mxu0 0
        %850 = vmatprep.subr.bf16.mxu0 0
        %851 = vmatpush1.bf16.xpose.msra.mxu0 0
        %852 = vmatprep.subr.bf16.mxu0 0
        %853 = vmatpush1.bf16.xpose.msra.mxu0 0
        %854 = vmatprep.subr.bf16.mxu0 0
        %855 = vmatpush1.bf16.xpose.msra.mxu0 0
        %856 = vmatprep.subr.bf16.mxu0 0
        %857 = vmatpush1.bf16.xpose.msra.mxu0 0
        %858 = vmatprep.subr.bf16.mxu0 0
        %859 = vmatpush1.bf16.xpose.msra.mxu0 0
        %860 = vmatprep.subr.bf16.mxu0 0
        %861 = vmatpush1.bf16.xpose.msra.mxu0 0
        %862 = vmatprep.mubr.bf16.mxu0 0
        %863 = vmatmul.mubr.bf16.gmra.mrb[0].mxu0 %v825
        %v864 = vpop.f32.mrb[0].mxu0
        %v865 = vadd.f32 0.0, %v864
        %v866 = vpop.f32.mrb[0].mxu0
        %v867 = vpop.f32.mrb[0].mxu0
        %v868 = vpop.f32.mrb[0].mxu0
        %869 = vdwg.mxu0
        %v870 = vsel %vm774, %v816, -inf
        %871 = vmax.xlane.f32.xlu0 %v870
        %v872 = vpop.xlane.xlu0 %871
        %v873 = vsel %vm774, %v865, -inf
        %874 = vmax.xlane.f32.xlu0 %v873
        %v875 = vpop.xlane.xlu0 %874
        %v876 = vsub.f32 %v816, %v872
        %v877 = vsub.f32 %v865, %v875
        %v878 = vmul.f32 %v876, 1.442695
        %v879 = vpow.pop %v878
        %v880 = vmul.f32 %v877, 1.442695
        %v881 = vpow.pop %v880
        %v882 = vsel %vm774, %v879, 0.0
        %883 = vadd.xlane.f32.xlu0 %v882
        %v884 = vpop.xlane.xlu0 %883
        %v885 = vsel %vm774, %v881, 0.0
        %886 = vadd.xlane.f32.xlu0 %v885
        %v887 = vpop.xlane.xlu0 %886
        %v888 = vrcp.pop %v884
        %v889 = vrcp.pop %v887
        %v890 = vmul.f32 %v879, %v888
        %v891 = vmul.f32 %v881, %v889
        %v892 = vpack.c.bf16 %v890, %v890
        %v893 = vpack.c.bf16 %v891, %v891
        %894 = vrot.lane.b32.xlu0 %v769, 64
        %v895 = vpop.permute.xlu0 %894
        %v897 = vsel %vm774, %v892, 0
        %vm899 = vcmask 1043456
        %v901 = vsel %vm899, %v895, 0
        %903 = vmatprep.subr.bf16.mxu0 0
        %904 = vmatpush1.bf16.msra.mxu0 %v901
        %905 = vmatprep.subr.bf16.mxu0 0
        %906 = vmatpush1.bf16.msra.mxu0 0
        %907 = vmatprep.subr.bf16.mxu0 0
        %908 = vmatpush1.bf16.msra.mxu0 0
        %909 = vmatprep.subr.bf16.mxu0 0
        %910 = vmatpush1.bf16.msra.mxu0 0
        %911 = vmatprep.subr.bf16.mxu0 0
        %912 = vmatpush1.bf16.msra.mxu0 0
        %913 = vmatprep.subr.bf16.mxu0 0
        %914 = vmatpush1.bf16.msra.mxu0 0
        %915 = vmatprep.subr.bf16.mxu0 0
        %916 = vmatpush1.bf16.msra.mxu0 0
        %917 = vmatprep.subr.bf16.mxu0 0
        %918 = vmatpush1.bf16.msra.mxu0 0
        %919 = vmatprep.subr.bf16.mxu0 0
        %920 = vmatpush1.bf16.msra.mxu0 0
        %921 = vmatprep.subr.bf16.mxu0 0
        %922 = vmatpush1.bf16.msra.mxu0 0
        %923 = vmatprep.subr.bf16.mxu0 0
        %924 = vmatpush1.bf16.msra.mxu0 0
        %925 = vmatprep.subr.bf16.mxu0 0
        %926 = vmatpush1.bf16.msra.mxu0 0
        %927 = vmatprep.subr.bf16.mxu0 0
        %928 = vmatpush1.bf16.msra.mxu0 0
        %929 = vmatprep.subr.bf16.mxu0 0
        %930 = vmatpush1.bf16.msra.mxu0 0
        %931 = vmatprep.subr.bf16.mxu0 0
        %932 = vmatpush1.bf16.msra.mxu0 0
        %933 = vmatprep.subr.bf16.mxu0 0
        %934 = vmatpush1.bf16.msra.mxu0 0
        %935 = vmatprep.mubr.bf16.mxu0 0
        %936 = vmatmul.mubr.bf16.gmra.mrb[0].mxu0 %v897
        %v937 = vpop.f32.mrb[0].mxu0
        %v938 = vadd.f32 0.0, %v937
        %v939 = vpop.f32.mrb[0].mxu0
        %v940 = vpop.f32.mrb[0].mxu0
        %v941 = vpop.f32.mrb[0].mxu0
        %942 = vdwg.mxu0
        %943 = vrot.lane.b32.xlu0 %v770, 64
        %v944 = vpop.permute.xlu0 %943
        %v946 = vsel %vm774, %v893, 0
        %v949 = vsel %vm899, %v944, 0
        %951 = vmatprep.subr.bf16.mxu0 0
        %952 = vmatpush1.bf16.msra.mxu0 %v949
        %953 = vmatprep.subr.bf16.mxu0 0
        %954 = vmatpush1.bf16.msra.mxu0 0
        %955 = vmatprep.subr.bf16.mxu0 0
        %956 = vmatpush1.bf16.msra.mxu0 0
        %957 = vmatprep.subr.bf16.mxu0 0
        %958 = vmatpush1.bf16.msra.mxu0 0
        %959 = vmatprep.subr.bf16.mxu0 0
        %960 = vmatpush1.bf16.msra.mxu0 0
        %961 = vmatprep.subr.bf16.mxu0 0
        %962 = vmatpush1.bf16.msra.mxu0 0
        %963 = vmatprep.subr.bf16.mxu0 0
        %964 = vmatpush1.bf16.msra.mxu0 0
        %965 = vmatprep.subr.bf16.mxu0 0
        %966 = vmatpush1.bf16.msra.mxu0 0
        %967 = vmatprep.subr.bf16.mxu0 0
        %968 = vmatpush1.bf16.msra.mxu0 0
        %969 = vmatprep.subr.bf16.mxu0 0
        %970 = vmatpush1.bf16.msra.mxu0 0
        %971 = vmatprep.subr.bf16.mxu0 0
        %972 = vmatpush1.bf16.msra.mxu0 0
        %973 = vmatprep.subr.bf16.mxu0 0
        %974 = vmatpush1.bf16.msra.mxu0 0
        %975 = vmatprep.subr.bf16.mxu0 0
        %976 = vmatpush1.bf16.msra.mxu0 0
        %977 = vmatprep.subr.bf16.mxu0 0
        %978 = vmatpush1.bf16.msra.mxu0 0
        %979 = vmatprep.subr.bf16.mxu0 0
        %980 = vmatpush1.bf16.msra.mxu0 0
        %981 = vmatprep.subr.bf16.mxu0 0
        %982 = vmatpush1.bf16.msra.mxu0 0
        %983 = vmatprep.mubr.bf16.mxu0 0
        %984 = vmatmul.mubr.bf16.gmra.mrb[0].mxu0 %v946
        %v985 = vpop.f32.mrb[0].mxu0
        %v986 = vadd.f32 0.0, %v985
        %v987 = vpop.f32.mrb[0].mxu0
        %v988 = vpop.f32.mrb[0].mxu0
        %v989 = vpop.f32.mrb[0].mxu0
        %990 = vdwg.mxu0
        %v991 = vpack.c.bf16 %v986, %v938
        %v992 = vld [vmem:[%s612] sm:$0xf]
        %994 = vrot.lane.b32.xlu0 %v767, 120
        %v995 = vpop.permute.xlu0 %994
        %996 = vrot.lane.b32.xlu0 %v769, 88
        %v997 = vpop.permute.xlu0 %996
        %v999 = vsel %vm774, %v995, 0
        %v1002 = vsel %vm774, %v997, 0
        %1004 = vmatprep.subr.bf16.mxu0 0
        %1005 = vmatpush1.bf16.xpose.msra.mxu0 %v1002
        %1006 = vmatprep.subr.bf16.mxu0 0
        %1007 = vmatpush1.bf16.xpose.msra.mxu0 0
        %1008 = vmatprep.subr.bf16.mxu0 0
        %1009 = vmatpush1.bf16.xpose.msra.mxu0 0
        %1010 = vmatprep.subr.bf16.mxu0 0
        %1011 = vmatpush1.bf16.xpose.msra.mxu0 0
        %1012 = vmatprep.subr.bf16.mxu0 0
        %1013 = vmatpush1.bf16.xpose.msra.mxu0 0
        %1014 = vmatprep.subr.bf16.mxu0 0
        %1015 = vmatpush1.bf16.xpose.msra.mxu0 0
        %1016 = vmatprep.subr.bf16.mxu0 0
        %1017 = vmatpush1.bf16.xpose.msra.mxu0 0
        %1018 = vmatprep.subr.bf16.mxu0 0
        %1019 = vmatpush1.bf16.xpose.msra.mxu0 0
        %1020 = vmatprep.subr.bf16.mxu0 0
        %1021 = vmatpush1.bf16.xpose.msra.mxu0 0
        %1022 = vmatprep.subr.bf16.mxu0 0
        %1023 = vmatpush1.bf16.xpose.msra.mxu0 0
        %1024 = vmatprep.subr.bf16.mxu0 0
        %1025 = vmatpush1.bf16.xpose.msra.mxu0 0
        %1026 = vmatprep.subr.bf16.mxu0 0
        %1027 = vmatpush1.bf16.xpose.msra.mxu0 0
        %1028 = vmatprep.subr.bf16.mxu0 0
        %1029 = vmatpush1.bf16.xpose.msra.mxu0 0
        %1030 = vmatprep.subr.bf16.mxu0 0
        %1031 = vmatpush1.bf16.xpose.msra.mxu0 0
        %1032 = vmatprep.subr.bf16.mxu0 0
        %1033 = vmatpush1.bf16.xpose.msra.mxu0 0
        %1034 = vmatprep.subr.bf16.mxu0 0
        %1035 = vmatpush1.bf16.xpose.msra.mxu0 0
        %1036 = vmatprep.mubr.bf16.mxu0 0
        %1037 = vmatmul.mubr.bf16.gmra.mrb[0].mxu0 %v999
        %v1038 = vpop.f32.mrb[0].mxu0
        %v1039 = vadd.f32 0.0, %v1038
        %v1040 = vpop.f32.mrb[0].mxu0
        %v1041 = vpop.f32.mrb[0].mxu0
        %v1042 = vpop.f32.mrb[0].mxu0
        %1043 = vdwg.mxu0
        %1045 = vrot.lane.b32.xlu0 %v768, 120
        %v1046 = vpop.permute.xlu0 %1045
        %1047 = vrot.lane.b32.xlu0 %v770, 88
        %v1048 = vpop.permute.xlu0 %1047
        %v1050 = vsel %vm774, %v1046, 0
        %v1053 = vsel %vm774, %v1048, 0
        %1055 = vmatprep.subr.bf16.mxu0 0
        %1056 = vmatpush1.bf16.xpose.msra.mxu0 %v1053
        %1057 = vmatprep.subr.bf16.mxu0 0
        %1058 = vmatpush1.bf16.xpose.msra.mxu0 0
        %1059 = vmatprep.subr.bf16.mxu0 0
        %1060 = vmatpush1.bf16.xpose.msra.mxu0 0
        %1061 = vmatprep.subr.bf16.mxu0 0
        %1062 = vmatpush1.bf16.xpose.msra.mxu0 0
        %1063 = vmatprep.subr.bf16.mxu0 0
        %1064 = vmatpush1.bf16.xpose.msra.mxu0 0
        %1065 = vmatprep.subr.bf16.mxu0 0
        %1066 = vmatpush1.bf16.xpose.msra.mxu0 0
        %1067 = vmatprep.subr.bf16.mxu0 0
        %1068 = vmatpush1.bf16.xpose.msra.mxu0 0
        %1069 = vmatprep.subr.bf16.mxu0 0
        %1070 = vmatpush1.bf16.xpose.msra.mxu0 0
        %1071 = vmatprep.subr.bf16.mxu0 0
        %1072 = vmatpush1.bf16.xpose.msra.mxu0 0
        %1073 = vmatprep.subr.bf16.mxu0 0
        %1074 = vmatpush1.bf16.xpose.msra.mxu0 0
        %1075 = vmatprep.subr.bf16.mxu0 0
        %1076 = vmatpush1.bf16.xpose.msra.mxu0 0
        %1077 = vmatprep.subr.bf16.mxu0 0
        %1078 = vmatpush1.bf16.xpose.msra.mxu0 0
        %1079 = vmatprep.subr.bf16.mxu0 0
        %1080 = vmatpush1.bf16.xpose.msra.mxu0 0
        %1081 = vmatprep.subr.bf16.mxu0 0
        %1082 = vmatpush1.bf16.xpose.msra.mxu0 0
        %1083 = vmatprep.subr.bf16.mxu0 0
        %1084 = vmatpush1.bf16.xpose.msra.mxu0 0
        %1085 = vmatprep.subr.bf16.mxu0 0
        %1086 = vmatpush1.bf16.xpose.msra.mxu0 0
        %1087 = vmatprep.mubr.bf16.mxu0 0
        %1088 = vmatmul.mubr.bf16.gmra.mrb[0].mxu0 %v1050
        %v1089 = vpop.f32.mrb[0].mxu0
        %v1090 = vadd.f32 0.0, %v1089
        %v1091 = vpop.f32.mrb[0].mxu0
        %v1092 = vpop.f32.mrb[0].mxu0
        %v1093 = vpop.f32.mrb[0].mxu0
        %1094 = vdwg.mxu0
        %v1095 = vsel %vm774, %v1039, -inf
        %1096 = vmax.xlane.f32.xlu0 %v1095
        %v1097 = vpop.xlane.xlu0 %1096
        %v1098 = vsel %vm774, %v1090, -inf
        %1099 = vmax.xlane.f32.xlu0 %v1098
        %v1100 = vpop.xlane.xlu0 %1099
        %v1101 = vsub.f32 %v1039, %v1097
        %v1102 = vsub.f32 %v1090, %v1100
        %v1103 = vmul.f32 %v1101, 1.442695
        %v1104 = vpow.pop %v1103
        %v1105 = vmul.f32 %v1102, 1.442695
        %v1106 = vpow.pop %v1105
        %v1107 = vsel %vm774, %v1104, 0.0
        %1108 = vadd.xlane.f32.xlu0 %v1107
        %v1109 = vpop.xlane.xlu0 %1108
        %v1110 = vsel %vm774, %v1106, 0.0
        %1111 = vadd.xlane.f32.xlu0 %v1110
        %v1112 = vpop.xlane.xlu0 %1111
        %v1113 = vrcp.pop %v1109
        %v1114 = vrcp.pop %v1112
        %v1115 = vmul.f32 %v1104, %v1113
        %v1116 = vmul.f32 %v1106, %v1114
        %v1117 = vpack.c.bf16 %v1115, %v1115
        %v1118 = vpack.c.bf16 %v1116, %v1116
        %1119 = vrot.lane.b32.xlu0 %v769, 56
        %v1120 = vpop.permute.xlu0 %1119
        %v1122 = vsel %vm774, %v1117, 0
        %v1125 = vsel %vm899, %v1120, 0
        %1127 = vmatprep.subr.bf16.mxu0 0
        %1128 = vmatpush1.bf16.msra.mxu0 %v1125
        %1129 = vmatprep.subr.bf16.mxu0 0
        %1130 = vmatpush1.bf16.msra.mxu0 0
        %1131 = vmatprep.subr.bf16.mxu0 0
        %1132 = vmatpush1.bf16.msra.mxu0 0
        %1133 = vmatprep.subr.bf16.mxu0 0
        %1134 = vmatpush1.bf16.msra.mxu0 0
        %1135 = vmatprep.subr.bf16.mxu0 0
        %1136 = vmatpush1.bf16.msra.mxu0 0
        %1137 = vmatprep.subr.bf16.mxu0 0
        %1138 = vmatpush1.bf16.msra.mxu0 0
        %1139 = vmatprep.subr.bf16.mxu0 0
        %1140 = vmatpush1.bf16.msra.mxu0 0
        %1141 = vmatprep.subr.bf16.mxu0 0
        %1142 = vmatpush1.bf16.msra.mxu0 0
        %1143 = vmatprep.subr.bf16.mxu0 0
        %1144 = vmatpush1.bf16.msra.mxu0 0
        %1145 = vmatprep.subr.bf16.mxu0 0
        %1146 = vmatpush1.bf16.msra.mxu0 0
        %1147 = vmatprep.subr.bf16.mxu0 0
        %1148 = vmatpush1.bf16.msra.mxu0 0
        %1149 = vmatprep.subr.bf16.mxu0 0
        %1150 = vmatpush1.bf16.msra.mxu0 0
        %1151 = vmatprep.subr.bf16.mxu0 0
        %1152 = vmatpush1.bf16.msra.mxu0 0
        %1153 = vmatprep.subr.bf16.mxu0 0
        %1154 = vmatpush1.bf16.msra.mxu0 0
        %1155 = vmatprep.subr.bf16.mxu0 0
        %1156 = vmatpush1.bf16.msra.mxu0 0
        %1157 = vmatprep.subr.bf16.mxu0 0
        %1158 = vmatpush1.bf16.msra.mxu0 0
        %1159 = vmatprep.mubr.bf16.mxu0 0
        %1160 = vmatmul.mubr.bf16.gmra.mrb[0].mxu0 %v1122
        %v1161 = vpop.f32.mrb[0].mxu0
        %v1162 = vadd.f32 0.0, %v1161
        %v1163 = vpop.f32.mrb[0].mxu0
        %v1164 = vpop.f32.mrb[0].mxu0
        %v1165 = vpop.f32.mrb[0].mxu0
        %1166 = vdwg.mxu0
        %1167 = vrot.lane.b32.xlu0 %v770, 56
        %v1168 = vpop.permute.xlu0 %1167
        %v1170 = vsel %vm774, %v1118, 0
        %v1173 = vsel %vm899, %v1168, 0
        %1175 = vmatprep.subr.bf16.mxu0 0
        %1176 = vmatpush1.bf16.msra.mxu0 %v1173
        %1177 = vmatprep.subr.bf16.mxu0 0
        %1178 = vmatpush1.bf16.msra.mxu0 0
        %1179 = vmatprep.subr.bf16.mxu0 0
        %1180 = vmatpush1.bf16.msra.mxu0 0
        %1181 = vmatprep.subr.bf16.mxu0 0
        %1182 = vmatpush1.bf16.msra.mxu0 0
        %1183 = vmatprep.subr.bf16.mxu0 0
        %1184 = vmatpush1.bf16.msra.mxu0 0
        %1185 = vmatprep.subr.bf16.mxu0 0
        %1186 = vmatpush1.bf16.msra.mxu0 0
        %1187 = vmatprep.subr.bf16.mxu0 0
        %1188 = vmatpush1.bf16.msra.mxu0 0
        %1189 = vmatprep.subr.bf16.mxu0 0
        %1190 = vmatpush1.bf16.msra.mxu0 0
        %1191 = vmatprep.subr.bf16.mxu0 0
        %1192 = vmatpush1.bf16.msra.mxu0 0
        %1193 = vmatprep.subr.bf16.mxu0 0
        %1194 = vmatpush1.bf16.msra.mxu0 0
        %1195 = vmatprep.subr.bf16.mxu0 0
        %1196 = vmatpush1.bf16.msra.mxu0 0
        %1197 = vmatprep.subr.bf16.mxu0 0
        %1198 = vmatpush1.bf16.msra.mxu0 0
        %1199 = vmatprep.subr.bf16.mxu0 0
        %1200 = vmatpush1.bf16.msra.mxu0 0
        %1201 = vmatprep.subr.bf16.mxu0 0
        %1202 = vmatpush1.bf16.msra.mxu0 0
        %1203 = vmatprep.subr.bf16.mxu0 0
        %1204 = vmatpush1.bf16.msra.mxu0 0
        %1205 = vmatprep.subr.bf16.mxu0 0
        %1206 = vmatpush1.bf16.msra.mxu0 0
        %1207 = vmatprep.mubr.bf16.mxu0 0
        %1208 = vmatmul.mubr.bf16.gmra.mrb[0].mxu0 %v1170
        %v1209 = vpop.f32.mrb[0].mxu0
        %v1210 = vadd.f32 0.0, %v1209
        %v1211 = vpop.f32.mrb[0].mxu0
        %v1212 = vpop.f32.mrb[0].mxu0
        %v1213 = vpop.f32.mrb[0].mxu0
        %1214 = vdwg.mxu0
        %v1215 = vpack.c.bf16 %v1210, %v1162
        %v1216 = vld [vmem:[%s612 + $0x4] sm:$0xf]
        %v1218 = vsel %vm774, %v1215, 0
        %v1221 = vsel %vm899, %v1216, 0
        %1223 = vmatprep.subr.bf16.mxu0 0
        %1224 = vmatpush1.bf16.msra.mxu0 %v1221
        %1225 = vmatprep.subr.bf16.mxu0 0
        %1226 = vmatpush1.bf16.msra.mxu0 0
        %1227 = vmatprep.subr.bf16.mxu0 0
        %1228 = vmatpush1.bf16.msra.mxu0 0
        %1229 = vmatprep.subr.bf16.mxu0 0
        %1230 = vmatpush1.bf16.msra.mxu0 0
        %1231 = vmatprep.subr.bf16.mxu0 0
        %1232 = vmatpush1.bf16.msra.mxu0 0
        %1233 = vmatprep.subr.bf16.mxu0 0
        %1234 = vmatpush1.bf16.msra.mxu0 0
        %1235 = vmatprep.subr.bf16.mxu0 0
        %1236 = vmatpush1.bf16.msra.mxu0 0
        %1237 = vmatprep.subr.bf16.mxu0 0
        %1238 = vmatpush1.bf16.msra.mxu0 0
        %1239 = vmatprep.subr.bf16.mxu0 0
        %1240 = vmatpush1.bf16.msra.mxu0 0
        %1241 = vmatprep.subr.bf16.mxu0 0
        %1242 = vmatpush1.bf16.msra.mxu0 0
        %1243 = vmatprep.subr.bf16.mxu0 0
        %1244 = vmatpush1.bf16.msra.mxu0 0
        %1245 = vmatprep.subr.bf16.mxu0 0
        %1246 = vmatpush1.bf16.msra.mxu0 0
        %1247 = vmatprep.subr.bf16.mxu0 0
        %1248 = vmatpush1.bf16.msra.mxu0 0
        %1249 = vmatprep.subr.bf16.mxu0 0
        %1250 = vmatpush1.bf16.msra.mxu0 0
        %1251 = vmatprep.subr.bf16.mxu0 0
        %1252 = vmatpush1.bf16.msra.mxu0 0
        %1253 = vmatprep.subr.bf16.mxu0 0
        %1254 = vmatpush1.bf16.msra.mxu0 0
        %1255 = vmatprep.mubr.bf16.mxu0 0
        %1256 = vmatmul.mubr.bf16.gmra.mrb[0].mxu0 %v1218
        %v1257 = vpop.f32.mrb[0].mxu0
        %v1258 = vadd.f32 0.0, %v1257
        %v1259 = vpop.f32.mrb[0].mxu0
        %v1260 = vpop.f32.mrb[0].mxu0
        %v1261 = vadd.f32 0.0, %v1260
        %v1262 = vpop.f32.mrb[0].mxu0
        %1263 = vdwg.mxu0
        %v1265 = vsel %vm774, %v991, 0
        %v1268 = vsel %vm899, %v992, 0
        %1270 = vmatprep.subr.bf16.mxu0 0
        %1271 = vmatpush1.bf16.msra.mxu0 %v1268
        %1272 = vmatprep.subr.bf16.mxu0 0
        %1273 = vmatpush1.bf16.msra.mxu0 0
        %1274 = vmatprep.subr.bf16.mxu0 0
        %1275 = vmatpush1.bf16.msra.mxu0 0
        %1276 = vmatprep.subr.bf16.mxu0 0
        %1277 = vmatpush1.bf16.msra.mxu0 0
        %1278 = vmatprep.subr.bf16.mxu0 0
        %1279 = vmatpush1.bf16.msra.mxu0 0
        %1280 = vmatprep.subr.bf16.mxu0 0
        %1281 = vmatpush1.bf16.msra.mxu0 0
        %1282 = vmatprep.subr.bf16.mxu0 0
        %1283 = vmatpush1.bf16.msra.mxu0 0
        %1284 = vmatprep.subr.bf16.mxu0 0
        %1285 = vmatpush1.bf16.msra.mxu0 0
        %1286 = vmatprep.subr.bf16.mxu0 0
        %1287 = vmatpush1.bf16.msra.mxu0 0
        %1288 = vmatprep.subr.bf16.mxu0 0
        %1289 = vmatpush1.bf16.msra.mxu0 0
        %1290 = vmatprep.subr.bf16.mxu0 0
        %1291 = vmatpush1.bf16.msra.mxu0 0
        %1292 = vmatprep.subr.bf16.mxu0 0
        %1293 = vmatpush1.bf16.msra.mxu0 0
        %1294 = vmatprep.subr.bf16.mxu0 0
        %1295 = vmatpush1.bf16.msra.mxu0 0
        %1296 = vmatprep.subr.bf16.mxu0 0
        %1297 = vmatpush1.bf16.msra.mxu0 0
        %1298 = vmatprep.subr.bf16.mxu0 0
        %1299 = vmatpush1.bf16.msra.mxu0 0
        %1300 = vmatprep.subr.bf16.mxu0 0
        %1301 = vmatpush1.bf16.msra.mxu0 0
        %1302 = vmatprep.mubr.bf16.mxu0 0
        %1303 = vmatmul.mubr.bf16.gmra.mrb[0].mxu0 %v1265
        %v1304 = vpop.f32.mrb[0].mxu0
        %v1305 = vadd.f32 %v1258, %v1304
        %v1306 = vpop.f32.mrb[0].mxu0
        %v1307 = vpop.f32.mrb[0].mxu0
        %v1308 = vadd.f32 %v1261, %v1307
        %v1309 = vpop.f32.mrb[0].mxu0
        %1310 = vdwg.mxu0
        %1311 = vrot.lane.b32.xlu0 %v767, 112
        %v1312 = vpop.permute.xlu0 %1311
        %1313 = vrot.lane.b32.xlu0 %v769, 80
        %v1314 = vpop.permute.xlu0 %1313
        %v1316 = vsel %vm774, %v1312, 0
        %v1319 = vsel %vm774, %v1314, 0
        %1321 = vmatprep.subr.bf16.mxu0 0
        %1322 = vmatpush1.bf16.xpose.msra.mxu0 %v1319
        %1323 = vmatprep.subr.bf16.mxu0 0
        %1324 = vmatpush1.bf16.xpose.msra.mxu0 0
        %1325 = vmatprep.subr.bf16.mxu0 0
        %1326 = vmatpush1.bf16.xpose.msra.mxu0 0
        %1327 = vmatprep.subr.bf16.mxu0 0
        %1328 = vmatpush1.bf16.xpose.msra.mxu0 0
        %1329 = vmatprep.subr.bf16.mxu0 0
        %1330 = vmatpush1.bf16.xpose.msra.mxu0 0
        %1331 = vmatprep.subr.bf16.mxu0 0
        %1332 = vmatpush1.bf16.xpose.msra.mxu0 0
        %1333 = vmatprep.subr.bf16.mxu0 0
        %1334 = vmatpush1.bf16.xpose.msra.mxu0 0
        %1335 = vmatprep.subr.bf16.mxu0 0
        %1336 = vmatpush1.bf16.xpose.msra.mxu0 0
        %1337 = vmatprep.subr.bf16.mxu0 0
        %1338 = vmatpush1.bf16.xpose.msra.mxu0 0
        %1339 = vmatprep.subr.bf16.mxu0 0
        %1340 = vmatpush1.bf16.xpose.msra.mxu0 0
        %1341 = vmatprep.subr.bf16.mxu0 0
        %1342 = vmatpush1.bf16.xpose.msra.mxu0 0
        %1343 = vmatprep.subr.bf16.mxu0 0
        %1344 = vmatpush1.bf16.xpose.msra.mxu0 0
        %1345 = vmatprep.subr.bf16.mxu0 0
        %1346 = vmatpush1.bf16.xpose.msra.mxu0 0
        %1347 = vmatprep.subr.bf16.mxu0 0
        %1348 = vmatpush1.bf16.xpose.msra.mxu0 0
        %1349 = vmatprep.subr.bf16.mxu0 0
        %1350 = vmatpush1.bf16.xpose.msra.mxu0 0
        %1351 = vmatprep.subr.bf16.mxu0 0
        %1352 = vmatpush1.bf16.xpose.msra.mxu0 0
        %1353 = vmatprep.mubr.bf16.mxu0 0
        %1354 = vmatmul.mubr.bf16.gmra.mrb[0].mxu0 %v1316
        %v1355 = vpop.f32.mrb[0].mxu0
        %v1356 = vadd.f32 0.0, %v1355
        %v1357 = vpop.f32.mrb[0].mxu0
        %v1358 = vpop.f32.mrb[0].mxu0
        %v1359 = vpop.f32.mrb[0].mxu0
        %1360 = vdwg.mxu0
        %1361 = vrot.lane.b32.xlu0 %v768, 112
        %v1362 = vpop.permute.xlu0 %1361
        %1363 = vrot.lane.b32.xlu0 %v770, 80
        %v1364 = vpop.permute.xlu0 %1363
        %v1366 = vsel %vm774, %v1362, 0
        %v1369 = vsel %vm774, %v1364, 0
        %1371 = vmatprep.subr.bf16.mxu0 0
        %1372 = vmatpush1.bf16.xpose.msra.mxu0 %v1369
        %1373 = vmatprep.subr.bf16.mxu0 0
        %1374 = vmatpush1.bf16.xpose.msra.mxu0 0
        %1375 = vmatprep.subr.bf16.mxu0 0
        %1376 = vmatpush1.bf16.xpose.msra.mxu0 0
        %1377 = vmatprep.subr.bf16.mxu0 0
        %1378 = vmatpush1.bf16.xpose.msra.mxu0 0
        %1379 = vmatprep.subr.bf16.mxu0 0
        %1380 = vmatpush1.bf16.xpose.msra.mxu0 0
        %1381 = vmatprep.subr.bf16.mxu0 0
        %1382 = vmatpush1.bf16.xpose.msra.mxu0 0
        %1383 = vmatprep.subr.bf16.mxu0 0
        %1384 = vmatpush1.bf16.xpose.msra.mxu0 0
        %1385 = vmatprep.subr.bf16.mxu0 0
        %1386 = vmatpush1.bf16.xpose.msra.mxu0 0
        %1387 = vmatprep.subr.bf16.mxu0 0
        %1388 = vmatpush1.bf16.xpose.msra.mxu0 0
        %1389 = vmatprep.subr.bf16.mxu0 0
        %1390 = vmatpush1.bf16.xpose.msra.mxu0 0
        %1391 = vmatprep.subr.bf16.mxu0 0
        %1392 = vmatpush1.bf16.xpose.msra.mxu0 0
        %1393 = vmatprep.subr.bf16.mxu0 0
        %1394 = vmatpush1.bf16.xpose.msra.mxu0 0
        %1395 = vmatprep.subr.bf16.mxu0 0
        %1396 = vmatpush1.bf16.xpose.msra.mxu0 0
        %1397 = vmatprep.subr.bf16.mxu0 0
        %1398 = vmatpush1.bf16.xpose.msra.mxu0 0
        %1399 = vmatprep.subr.bf16.mxu0 0
        %1400 = vmatpush1.bf16.xpose.msra.mxu0 0
        %1401 = vmatprep.subr.bf16.mxu0 0
        %1402 = vmatpush1.bf16.xpose.msra.mxu0 0
        %1403 = vmatprep.mubr.bf16.mxu0 0
        %1404 = vmatmul.mubr.bf16.gmra.mrb[0].mxu0 %v1366
        %v1405 = vpop.f32.mrb[0].mxu0
        %v1406 = vadd.f32 0.0, %v1405
        %v1407 = vpop.f32.mrb[0].mxu0
        %v1408 = vpop.f32.mrb[0].mxu0
        %v1409 = vpop.f32.mrb[0].mxu0
        %1410 = vdwg.mxu0
        %v1411 = vsel %vm774, %v1356, -inf
        %1412 = vmax.xlane.f32.xlu0 %v1411
        %v1413 = vpop.xlane.xlu0 %1412
        %v1414 = vsel %vm774, %v1406, -inf
        %1415 = vmax.xlane.f32.xlu0 %v1414
        %v1416 = vpop.xlane.xlu0 %1415
        %v1417 = vsub.f32 %v1356, %v1413
        %v1418 = vsub.f32 %v1406, %v1416
        %v1419 = vmul.f32 %v1417, 1.442695
        %v1420 = vpow.pop %v1419
        %v1421 = vmul.f32 %v1418, 1.442695
        %v1422 = vpow.pop %v1421
        %v1423 = vsel %vm774, %v1420, 0.0
        %1424 = vadd.xlane.f32.xlu0 %v1423
        %v1425 = vpop.xlane.xlu0 %1424
        %v1426 = vsel %vm774, %v1422, 0.0
        %1427 = vadd.xlane.f32.xlu0 %v1426
        %v1428 = vpop.xlane.xlu0 %1427
        %v1429 = vrcp.pop %v1425
        %v1430 = vrcp.pop %v1428
        %v1431 = vmul.f32 %v1420, %v1429
        %v1432 = vmul.f32 %v1422, %v1430
        %v1433 = vpack.c.bf16 %v1431, %v1431
        %v1434 = vpack.c.bf16 %v1432, %v1432
        %1435 = vrot.lane.b32.xlu0 %v769, 48
        %v1436 = vpop.permute.xlu0 %1435
        %v1438 = vsel %vm774, %v1433, 0
        %v1441 = vsel %vm899, %v1436, 0
        %1443 = vmatprep.subr.bf16.mxu0 0
        %1444 = vmatpush1.bf16.msra.mxu0 %v1441
        %1445 = vmatprep.subr.bf16.mxu0 0
        %1446 = vmatpush1.bf16.msra.mxu0 0
        %1447 = vmatprep.subr.bf16.mxu0 0
        %1448 = vmatpush1.bf16.msra.mxu0 0
        %1449 = vmatprep.subr.bf16.mxu0 0
        %1450 = vmatpush1.bf16.msra.mxu0 0
        %1451 = vmatprep.subr.bf16.mxu0 0
        %1452 = vmatpush1.bf16.msra.mxu0 0
        %1453 = vmatprep.subr.bf16.mxu0 0
        %1454 = vmatpush1.bf16.msra.mxu0 0
        %1455 = vmatprep.subr.bf16.mxu0 0
        %1456 = vmatpush1.bf16.msra.mxu0 0
        %1457 = vmatprep.subr.bf16.mxu0 0
        %1458 = vmatpush1.bf16.msra.mxu0 0
        %1459 = vmatprep.subr.bf16.mxu0 0
        %1460 = vmatpush1.bf16.msra.mxu0 0
        %1461 = vmatprep.subr.bf16.mxu0 0
        %1462 = vmatpush1.bf16.msra.mxu0 0
        %1463 = vmatprep.subr.bf16.mxu0 0
        %1464 = vmatpush1.bf16.msra.mxu0 0
        %1465 = vmatprep.subr.bf16.mxu0 0
        %1466 = vmatpush1.bf16.msra.mxu0 0
        %1467 = vmatprep.subr.bf16.mxu0 0
        %1468 = vmatpush1.bf16.msra.mxu0 0
        %1469 = vmatprep.subr.bf16.mxu0 0
        %1470 = vmatpush1.bf16.msra.mxu0 0
        %1471 = vmatprep.subr.bf16.mxu0 0
        %1472 = vmatpush1.bf16.msra.mxu0 0
        %1473 = vmatprep.subr.bf16.mxu0 0
        %1474 = vmatpush1.bf16.msra.mxu0 0
        %1475 = vmatprep.mubr.bf16.mxu0 0
        %1476 = vmatmul.mubr.bf16.gmra.mrb[0].mxu0 %v1438
        %v1477 = vpop.f32.mrb[0].mxu0
        %v1478 = vadd.f32 0.0, %v1477
        %v1479 = vpop.f32.mrb[0].mxu0
        %v1480 = vpop.f32.mrb[0].mxu0
        %v1481 = vpop.f32.mrb[0].mxu0
        %1482 = vdwg.mxu0
        %1483 = vrot.lane.b32.xlu0 %v770, 48
        %v1484 = vpop.permute.xlu0 %1483
        %v1486 = vsel %vm774, %v1434, 0
        %v1489 = vsel %vm899, %v1484, 0
        %1491 = vmatprep.subr.bf16.mxu0 0
        %1492 = vmatpush1.bf16.msra.mxu0 %v1489
        %1493 = vmatprep.subr.bf16.mxu0 0
        %1494 = vmatpush1.bf16.msra.mxu0 0
        %1495 = vmatprep.subr.bf16.mxu0 0
        %1496 = vmatpush1.bf16.msra.mxu0 0
        %1497 = vmatprep.subr.bf16.mxu0 0
        %1498 = vmatpush1.bf16.msra.mxu0 0
        %1499 = vmatprep.subr.bf16.mxu0 0
        %1500 = vmatpush1.bf16.msra.mxu0 0
        %1501 = vmatprep.subr.bf16.mxu0 0
        %1502 = vmatpush1.bf16.msra.mxu0 0
        %1503 = vmatprep.subr.bf16.mxu0 0
        %1504 = vmatpush1.bf16.msra.mxu0 0
        %1505 = vmatprep.subr.bf16.mxu0 0
        %1506 = vmatpush1.bf16.msra.mxu0 0
        %1507 = vmatprep.subr.bf16.mxu0 0
        %1508 = vmatpush1.bf16.msra.mxu0 0
        %1509 = vmatprep.subr.bf16.mxu0 0
        %1510 = vmatpush1.bf16.msra.mxu0 0
        %1511 = vmatprep.subr.bf16.mxu0 0
        %1512 = vmatpush1.bf16.msra.mxu0 0
        %1513 = vmatprep.subr.bf16.mxu0 0
        %1514 = vmatpush1.bf16.msra.mxu0 0
        %1515 = vmatprep.subr.bf16.mxu0 0
        %1516 = vmatpush1.bf16.msra.mxu0 0
        %1517 = vmatprep.subr.bf16.mxu0 0
        %1518 = vmatpush1.bf16.msra.mxu0 0
        %1519 = vmatprep.subr.bf16.mxu0 0
        %1520 = vmatpush1.bf16.msra.mxu0 0
        %1521 = vmatprep.subr.bf16.mxu0 0
        %1522 = vmatpush1.bf16.msra.mxu0 0
        %1523 = vmatprep.mubr.bf16.mxu0 0
        %1524 = vmatmul.mubr.bf16.gmra.mrb[0].mxu0 %v1486
        %v1525 = vpop.f32.mrb[0].mxu0
        %v1526 = vadd.f32 0.0, %v1525
        %v1527 = vpop.f32.mrb[0].mxu0
        %v1528 = vpop.f32.mrb[0].mxu0
        %v1529 = vpop.f32.mrb[0].mxu0
        %1530 = vdwg.mxu0
        %v1531 = vpack.c.bf16 %v1526, %v1478
        %v1532 = vld [vmem:[%s612 + $0x8] sm:$0xf]
        %v1534 = vsel %vm774, %v1531, 0
        %v1537 = vsel %vm899, %v1532, 0
        %1539 = vmatprep.subr.bf16.mxu0 0
        %1540 = vmatpush1.bf16.msra.mxu0 %v1537
        %1541 = vmatprep.subr.bf16.mxu0 0
        %1542 = vmatpush1.bf16.msra.mxu0 0
        %1543 = vmatprep.subr.bf16.mxu0 0
        %1544 = vmatpush1.bf16.msra.mxu0 0
        %1545 = vmatprep.subr.bf16.mxu0 0
        %1546 = vmatpush1.bf16.msra.mxu0 0
        %1547 = vmatprep.subr.bf16.mxu0 0
        %1548 = vmatpush1.bf16.msra.mxu0 0
        %1549 = vmatprep.subr.bf16.mxu0 0
        %1550 = vmatpush1.bf16.msra.mxu0 0
        %1551 = vmatprep.subr.bf16.mxu0 0
        %1552 = vmatpush1.bf16.msra.mxu0 0
        %1553 = vmatprep.subr.bf16.mxu0 0
        %1554 = vmatpush1.bf16.msra.mxu0 0
        %1555 = vmatprep.subr.bf16.mxu0 0
        %1556 = vmatpush1.bf16.msra.mxu0 0
        %1557 = vmatprep.subr.bf16.mxu0 0
        %1558 = vmatpush1.bf16.msra.mxu0 0
        %1559 = vmatprep.subr.bf16.mxu0 0
        %1560 = vmatpush1.bf16.msra.mxu0 0
        %1561 = vmatprep.subr.bf16.mxu0 0
        %1562 = vmatpush1.bf16.msra.mxu0 0
        %1563 = vmatprep.subr.bf16.mxu0 0
        %1564 = vmatpush1.bf16.msra.mxu0 0
        %1565 = vmatprep.subr.bf16.mxu0 0
        %1566 = vmatpush1.bf16.msra.mxu0 0
        %1567 = vmatprep.subr.bf16.mxu0 0
        %1568 = vmatpush1.bf16.msra.mxu0 0
        %1569 = vmatprep.subr.bf16.mxu0 0
        %1570 = vmatpush1.bf16.msra.mxu0 0
        %1571 = vmatprep.mubr.bf16.mxu0 0
        %1572 = vmatmul.mubr.bf16.gmra.mrb[0].mxu0 %v1534
        %v1573 = vpop.f32.mrb[0].mxu0
        %v1574 = vadd.f32 0.0, %v1573
        %v1575 = vpop.f32.mrb[0].mxu0
        %v1576 = vpop.f32.mrb[0].mxu0
        %v1577 = vadd.f32 0.0, %v1576
        %v1578 = vpop.f32.mrb[0].mxu0
        %1579 = vdwg.mxu0
        %v1580 = vadd.f32 %v1305, %v1574
        %v1581 = vadd.f32 %v1308, %v1577
        %1582 = vrot.lane.b32.xlu0 %v767, 104
        %v1583 = vpop.permute.xlu0 %1582
        %1584 = vrot.lane.b32.xlu0 %v769, 72
        %v1585 = vpop.permute.xlu0 %1584
        %v1587 = vsel %vm774, %v1583, 0
        %v1590 = vsel %vm774, %v1585, 0
        %1592 = vmatprep.subr.bf16.mxu0 0
        %1593 = vmatpush1.bf16.xpose.msra.mxu0 %v1590
        %1594 = vmatprep.subr.bf16.mxu0 0
        %1595 = vmatpush1.bf16.xpose.msra.mxu0 0
        %1596 = vmatprep.subr.bf16.mxu0 0
        %1597 = vmatpush1.bf16.xpose.msra.mxu0 0
        %1598 = vmatprep.subr.bf16.mxu0 0
        %1599 = vmatpush1.bf16.xpose.msra.mxu0 0
        %1600 = vmatprep.subr.bf16.mxu0 0
        %1601 = vmatpush1.bf16.xpose.msra.mxu0 0
        %1602 = vmatprep.subr.bf16.mxu0 0
        %1603 = vmatpush1.bf16.xpose.msra.mxu0 0
        %1604 = vmatprep.subr.bf16.mxu0 0
        %1605 = vmatpush1.bf16.xpose.msra.mxu0 0
        %1606 = vmatprep.subr.bf16.mxu0 0
        %1607 = vmatpush1.bf16.xpose.msra.mxu0 0
        %1608 = vmatprep.subr.bf16.mxu0 0
        %1609 = vmatpush1.bf16.xpose.msra.mxu0 0
        %1610 = vmatprep.subr.bf16.mxu0 0
        %1611 = vmatpush1.bf16.xpose.msra.mxu0 0
        %1612 = vmatprep.subr.bf16.mxu0 0
        %1613 = vmatpush1.bf16.xpose.msra.mxu0 0
        %1614 = vmatprep.subr.bf16.mxu0 0
        %1615 = vmatpush1.bf16.xpose.msra.mxu0 0
        %1616 = vmatprep.subr.bf16.mxu0 0
        %1617 = vmatpush1.bf16.xpose.msra.mxu0 0
        %1618 = vmatprep.subr.bf16.mxu0 0
        %1619 = vmatpush1.bf16.xpose.msra.mxu0 0
        %1620 = vmatprep.subr.bf16.mxu0 0
        %1621 = vmatpush1.bf16.xpose.msra.mxu0 0
        %1622 = vmatprep.subr.bf16.mxu0 0
        %1623 = vmatpush1.bf16.xpose.msra.mxu0 0
        %1624 = vmatprep.mubr.bf16.mxu0 0
        %1625 = vmatmul.mubr.bf16.gmra.mrb[0].mxu0 %v1587
        %v1626 = vpop.f32.mrb[0].mxu0
        %v1627 = vadd.f32 0.0, %v1626
        %v1628 = vpop.f32.mrb[0].mxu0
        %v1629 = vpop.f32.mrb[0].mxu0
        %v1630 = vpop.f32.mrb[0].mxu0
        %1631 = vdwg.mxu0
        %1632 = vrot.lane.b32.xlu0 %v768, 104
        %v1633 = vpop.permute.xlu0 %1632
        %1634 = vrot.lane.b32.xlu0 %v770, 72
        %v1635 = vpop.permute.xlu0 %1634
        %v1637 = vsel %vm774, %v1633, 0
        %v1640 = vsel %vm774, %v1635, 0
        %1642 = vmatprep.subr.bf16.mxu0 0
        %1643 = vmatpush1.bf16.xpose.msra.mxu0 %v1640
        %1644 = vmatprep.subr.bf16.mxu0 0
        %1645 = vmatpush1.bf16.xpose.msra.mxu0 0
        %1646 = vmatprep.subr.bf16.mxu0 0
        %1647 = vmatpush1.bf16.xpose.msra.mxu0 0
        %1648 = vmatprep.subr.bf16.mxu0 0
        %1649 = vmatpush1.bf16.xpose.msra.mxu0 0
        %1650 = vmatprep.subr.bf16.mxu0 0
        %1651 = vmatpush1.bf16.xpose.msra.mxu0 0
        %1652 = vmatprep.subr.bf16.mxu0 0
        %1653 = vmatpush1.bf16.xpose.msra.mxu0 0
        %1654 = vmatprep.subr.bf16.mxu0 0
        %1655 = vmatpush1.bf16.xpose.msra.mxu0 0
        %1656 = vmatprep.subr.bf16.mxu0 0
        %1657 = vmatpush1.bf16.xpose.msra.mxu0 0
        %1658 = vmatprep.subr.bf16.mxu0 0
        %1659 = vmatpush1.bf16.xpose.msra.mxu0 0
        %1660 = vmatprep.subr.bf16.mxu0 0
        %1661 = vmatpush1.bf16.xpose.msra.mxu0 0
        %1662 = vmatprep.subr.bf16.mxu0 0
        %1663 = vmatpush1.bf16.xpose.msra.mxu0 0
        %1664 = vmatprep.subr.bf16.mxu0 0
        %1665 = vmatpush1.bf16.xpose.msra.mxu0 0
        %1666 = vmatprep.subr.bf16.mxu0 0
        %1667 = vmatpush1.bf16.xpose.msra.mxu0 0
        %1668 = vmatprep.subr.bf16.mxu0 0
        %1669 = vmatpush1.bf16.xpose.msra.mxu0 0
        %1670 = vmatprep.subr.bf16.mxu0 0
        %1671 = vmatpush1.bf16.xpose.msra.mxu0 0
        %1672 = vmatprep.subr.bf16.mxu0 0
        %1673 = vmatpush1.bf16.xpose.msra.mxu0 0
        %1674 = vmatprep.mubr.bf16.mxu0 0
        %1675 = vmatmul.mubr.bf16.gmra.mrb[0].mxu0 %v1637
        %v1676 = vpop.f32.mrb[0].mxu0
        %v1677 = vadd.f32 0.0, %v1676
        %v1678 = vpop.f32.mrb[0].mxu0
        %v1679 = vpop.f32.mrb[0].mxu0
        %v1680 = vpop.f32.mrb[0].mxu0
        %1681 = vdwg.mxu0
        %v1682 = vsel %vm774, %v1627, -inf
        %1683 = vmax.xlane.f32.xlu0 %v1682
        %v1684 = vpop.xlane.xlu0 %1683
        %v1685 = vsel %vm774, %v1677, -inf
        %1686 = vmax.xlane.f32.xlu0 %v1685
        %v1687 = vpop.xlane.xlu0 %1686
        %v1688 = vsub.f32 %v1627, %v1684
        %v1689 = vsub.f32 %v1677, %v1687
        %v1690 = vmul.f32 %v1688, 1.442695
        %v1691 = vpow.pop %v1690
        %v1692 = vmul.f32 %v1689, 1.442695
        %v1693 = vpow.pop %v1692
        %v1694 = vsel %vm774, %v1691, 0.0
        %1695 = vadd.xlane.f32.xlu0 %v1694
        %v1696 = vpop.xlane.xlu0 %1695
        %v1697 = vsel %vm774, %v1693, 0.0
        %1698 = vadd.xlane.f32.xlu0 %v1697
        %v1699 = vpop.xlane.xlu0 %1698
        %v1700 = vrcp.pop %v1696
        %v1701 = vrcp.pop %v1699
        %v1702 = vmul.f32 %v1691, %v1700
        %v1703 = vmul.f32 %v1693, %v1701
        %v1704 = vpack.c.bf16 %v1702, %v1702
        %v1705 = vpack.c.bf16 %v1703, %v1703
        %1706 = vrot.lane.b32.xlu0 %v769, 40
        %v1707 = vpop.permute.xlu0 %1706
        %v1709 = vsel %vm774, %v1704, 0
        %v1712 = vsel %vm899, %v1707, 0
        %1714 = vmatprep.subr.bf16.mxu0 0
        %1715 = vmatpush1.bf16.msra.mxu0 %v1712
        %1716 = vmatprep.subr.bf16.mxu0 0
        %1717 = vmatpush1.bf16.msra.mxu0 0
        %1718 = vmatprep.subr.bf16.mxu0 0
        %1719 = vmatpush1.bf16.msra.mxu0 0
        %1720 = vmatprep.subr.bf16.mxu0 0
        %1721 = vmatpush1.bf16.msra.mxu0 0
        %1722 = vmatprep.subr.bf16.mxu0 0
        %1723 = vmatpush1.bf16.msra.mxu0 0
        %1724 = vmatprep.subr.bf16.mxu0 0
        %1725 = vmatpush1.bf16.msra.mxu0 0
        %1726 = vmatprep.subr.bf16.mxu0 0
        %1727 = vmatpush1.bf16.msra.mxu0 0
        %1728 = vmatprep.subr.bf16.mxu0 0
        %1729 = vmatpush1.bf16.msra.mxu0 0
        %1730 = vmatprep.subr.bf16.mxu0 0
        %1731 = vmatpush1.bf16.msra.mxu0 0
        %1732 = vmatprep.subr.bf16.mxu0 0
        %1733 = vmatpush1.bf16.msra.mxu0 0
        %1734 = vmatprep.subr.bf16.mxu0 0
        %1735 = vmatpush1.bf16.msra.mxu0 0
        %1736 = vmatprep.subr.bf16.mxu0 0
        %1737 = vmatpush1.bf16.msra.mxu0 0
        %1738 = vmatprep.subr.bf16.mxu0 0
        %1739 = vmatpush1.bf16.msra.mxu0 0
        %1740 = vmatprep.subr.bf16.mxu0 0
        %1741 = vmatpush1.bf16.msra.mxu0 0
        %1742 = vmatprep.subr.bf16.mxu0 0
        %1743 = vmatpush1.bf16.msra.mxu0 0
        %1744 = vmatprep.subr.bf16.mxu0 0
        %1745 = vmatpush1.bf16.msra.mxu0 0
        %1746 = vmatprep.mubr.bf16.mxu0 0
        %1747 = vmatmul.mubr.bf16.gmra.mrb[0].mxu0 %v1709
        %v1748 = vpop.f32.mrb[0].mxu0
        %v1749 = vadd.f32 0.0, %v1748
        %v1750 = vpop.f32.mrb[0].mxu0
        %v1751 = vpop.f32.mrb[0].mxu0
        %v1752 = vpop.f32.mrb[0].mxu0
        %1753 = vdwg.mxu0
        %1754 = vrot.lane.b32.xlu0 %v770, 40
        %v1755 = vpop.permute.xlu0 %1754
        %v1757 = vsel %vm774, %v1705, 0
        %v1760 = vsel %vm899, %v1755, 0
        %1762 = vmatprep.subr.bf16.mxu0 0
        %1763 = vmatpush1.bf16.msra.mxu0 %v1760
        %1764 = vmatprep.subr.bf16.mxu0 0
        %1765 = vmatpush1.bf16.msra.mxu0 0
        %1766 = vmatprep.subr.bf16.mxu0 0
        %1767 = vmatpush1.bf16.msra.mxu0 0
        %1768 = vmatprep.subr.bf16.mxu0 0
        %1769 = vmatpush1.bf16.msra.mxu0 0
        %1770 = vmatprep.subr.bf16.mxu0 0
        %1771 = vmatpush1.bf16.msra.mxu0 0
        %1772 = vmatprep.subr.bf16.mxu0 0
        %1773 = vmatpush1.bf16.msra.mxu0 0
        %1774 = vmatprep.subr.bf16.mxu0 0
        %1775 = vmatpush1.bf16.msra.mxu0 0
        %1776 = vmatprep.subr.bf16.mxu0 0
        %1777 = vmatpush1.bf16.msra.mxu0 0
        %1778 = vmatprep.subr.bf16.mxu0 0
        %1779 = vmatpush1.bf16.msra.mxu0 0
        %1780 = vmatprep.subr.bf16.mxu0 0
        %1781 = vmatpush1.bf16.msra.mxu0 0
        %1782 = vmatprep.subr.bf16.mxu0 0
        %1783 = vmatpush1.bf16.msra.mxu0 0
        %1784 = vmatprep.subr.bf16.mxu0 0
        %1785 = vmatpush1.bf16.msra.mxu0 0
        %1786 = vmatprep.subr.bf16.mxu0 0
        %1787 = vmatpush1.bf16.msra.mxu0 0
        %1788 = vmatprep.subr.bf16.mxu0 0
        %1789 = vmatpush1.bf16.msra.mxu0 0
        %1790 = vmatprep.subr.bf16.mxu0 0
        %1791 = vmatpush1.bf16.msra.mxu0 0
        %1792 = vmatprep.subr.bf16.mxu0 0
        %1793 = vmatpush1.bf16.msra.mxu0 0
        %1794 = vmatprep.mubr.bf16.mxu0 0
        %1795 = vmatmul.mubr.bf16.gmra.mrb[0].mxu0 %v1757
        %v1796 = vpop.f32.mrb[0].mxu0
        %v1797 = vadd.f32 0.0, %v1796
        %v1798 = vpop.f32.mrb[0].mxu0
        %v1799 = vpop.f32.mrb[0].mxu0
        %v1800 = vpop.f32.mrb[0].mxu0
        %1801 = vdwg.mxu0
        %v1802 = vpack.c.bf16 %v1797, %v1749
        %v1803 = vld [vmem:[%s612 + $0xc] sm:$0xf]
        %v1805 = vsel %vm774, %v1802, 0
        %v1808 = vsel %vm899, %v1803, 0
        %1810 = vmatprep.subr.bf16.mxu0 0
        %1811 = vmatpush1.bf16.msra.mxu0 %v1808
        %1812 = vmatprep.subr.bf16.mxu0 0
        %1813 = vmatpush1.bf16.msra.mxu0 0
        %1814 = vmatprep.subr.bf16.mxu0 0
        %1815 = vmatpush1.bf16.msra.mxu0 0
        %1816 = vmatprep.subr.bf16.mxu0 0
        %1817 = vmatpush1.bf16.msra.mxu0 0
        %1818 = vmatprep.subr.bf16.mxu0 0
        %1819 = vmatpush1.bf16.msra.mxu0 0
        %1820 = vmatprep.subr.bf16.mxu0 0
        %1821 = vmatpush1.bf16.msra.mxu0 0
        %1822 = vmatprep.subr.bf16.mxu0 0
        %1823 = vmatpush1.bf16.msra.mxu0 0
        %1824 = vmatprep.subr.bf16.mxu0 0
        %1825 = vmatpush1.bf16.msra.mxu0 0
        %1826 = vmatprep.subr.bf16.mxu0 0
        %1827 = vmatpush1.bf16.msra.mxu0 0
        %1828 = vmatprep.subr.bf16.mxu0 0
        %1829 = vmatpush1.bf16.msra.mxu0 0
        %1830 = vmatprep.subr.bf16.mxu0 0
        %1831 = vmatpush1.bf16.msra.mxu0 0
        %1832 = vmatprep.subr.bf16.mxu0 0
        %1833 = vmatpush1.bf16.msra.mxu0 0
        %1834 = vmatprep.subr.bf16.mxu0 0
        %1835 = vmatpush1.bf16.msra.mxu0 0
        %1836 = vmatprep.subr.bf16.mxu0 0
        %1837 = vmatpush1.bf16.msra.mxu0 0
        %1838 = vmatprep.subr.bf16.mxu0 0
        %1839 = vmatpush1.bf16.msra.mxu0 0
        %1840 = vmatprep.subr.bf16.mxu0 0
        %1841 = vmatpush1.bf16.msra.mxu0 0
        %1842 = vmatprep.mubr.bf16.mxu0 0
        %1843 = vmatmul.mubr.bf16.gmra.mrb[0].mxu0 %v1805
        %v1844 = vpop.f32.mrb[0].mxu0
        %v1845 = vadd.f32 0.0, %v1844
        %v1846 = vpop.f32.mrb[0].mxu0
        %v1847 = vpop.f32.mrb[0].mxu0
        %v1848 = vadd.f32 0.0, %v1847
        %v1849 = vpop.f32.mrb[0].mxu0
        %1850 = vdwg.mxu0
        %v1851 = vadd.f32 %v1580, %v1845
        %v1852 = vadd.f32 %v1581, %v1848
        %v1853 = vld [vmem:[%s615] sm:$0x1]
        %v1855 = vlaneseq
        %v1856 = vshrl.u32 %v1855, 7
        %v1857 = vsub.s32 0, %v1856
        %v1858 = vrot.slane %v1853, %v1857
        %v1860 = vadd.f32 %v1851, %v1858
        %v1861 = vadd.f32 %v1852, %v1858
        %v1862 = vadd.f32 %v649, %v1860
        %v1863 = vadd.f32 %v650, %v1861
        %v1864 = vld [vmem:[%s618] sm:$0x1]
        %v1865 = vld [vmem:[%s621] sm:$0x1]
        %v1866 = vsel %vm653, %v1862, 0.0
        %1867 = vadd.xlane.f32.xlu0 %v1866
        %v1868 = vpop.xlane.xlu0 %1867
        %v1869 = vsel %vm653, %v1863, 0.0
        %1870 = vadd.xlane.f32.xlu0 %v1869
        %v1871 = vpop.xlane.xlu0 %1870
        %v1872 = vmul.f32 %v1868, %v660
        %v1873 = vmul.f32 %v1871, %v660
        %v1874 = vsub.f32 %v1862, %v1872
        %v1875 = vsub.f32 %v1863, %v1873
        %v1876 = vmul.f32 %v1874, %v1874
        %v1877 = vmul.f32 %v1875, %v1875
        %v1878 = vsel %vm653, %v1876, 0.0
        %1879 = vadd.xlane.f32.xlu0 %v1878
        %v1880 = vpop.xlane.xlu0 %1879
        %v1881 = vsel %vm653, %v1877, 0.0
        %1882 = vadd.xlane.f32.xlu0 %v1881
        %v1883 = vpop.xlane.xlu0 %1882
        %v1884 = vmul.f32 %v1880, %v660
        %v1885 = vmul.f32 %v1883, %v660
        %v1886 = vadd.f32 %v1884, 1e-05
        %v1887 = vadd.f32 %v1885, 1e-05
        %v1888 = vrsqrt.pop %v1886
        %v1889 = vrsqrt.pop %v1887
        %v1890 = vmul.f32 %v1874, %v1888
        %v1891 = vmul.f32 %v1875, %v1889
        %v1893 = vlaneseq
        %v1894 = vshrl.u32 %v1893, 7
        %v1895 = vsub.s32 0, %v1894
        %v1896 = vrot.slane %v1864, %v1895
        %v1898 = vmul.f32 %v1890, %v1896
        %v1899 = vmul.f32 %v1891, %v1896
        %v1901 = vlaneseq
        %v1902 = vshrl.u32 %v1901, 7
        %v1903 = vsub.s32 0, %v1902
        %v1904 = vrot.slane %v1865, %v1903
        %v1906 = vadd.f32 %v1898, %v1904
        %v1907 = vadd.f32 %v1899, %v1904
        %v1908 = vpack.c.bf16 %v1907, %v1906
        %v1909 = vld [vmem:[%s626] sm:$0xf]
        %v1910 = vld [vmem:[%s626 + $0x4] sm:$0xf]
        %v1911 = vld [vmem:[%s626 + $0x8] sm:$0xf]
        %v1912 = vld [vmem:[%s626 + $0xc] sm:$0xf]
        %v1913 = vld [vmem:[%s629] sm:$0x1]
        %v1915 = vlaneseq
        %v1916 = vshrl.u32 %v1915, 7
        %v1917 = vsub.s32 0, %v1916
        %v1918 = vrot.slane %v1913, %v1917
        %v1924 = vunpack.c.l.b16 %v1909
        %v1925 = vunpack.c.l.b16 %v1910
        %v1926 = vunpack.c.l.b16 %v1911
        %v1927 = vunpack.c.l.b16 %v1912
        %v1928 = vpack.c.b16 %v1925, %v1924
        %v1929 = vpack.c.b16 %v1927, %v1926
        %v1933 = vsel %vm653, %v1908, 0
        %1935 = vmatprep.subr.bf16.mxu0 0
        %1936 = vmatpush1.bf16.msra.mxu0 %v1928
        %1937 = vmatprep.subr.bf16.mxu0 0
        %1938 = vmatpush1.bf16.msra.mxu0 %v1929
        %1939 = vmatprep.subr.bf16.mxu0 0
        %1940 = vmatpush1.bf16.msra.mxu0 0
        %1941 = vmatprep.subr.bf16.mxu0 0
        %1942 = vmatpush1.bf16.msra.mxu0 0
        %1943 = vmatprep.subr.bf16.mxu0 0
        %1944 = vmatpush1.bf16.msra.mxu0 0
        %1945 = vmatprep.subr.bf16.mxu0 0
        %1946 = vmatpush1.bf16.msra.mxu0 0
        %1947 = vmatprep.subr.bf16.mxu0 0
        %1948 = vmatpush1.bf16.msra.mxu0 0
        %1949 = vmatprep.subr.bf16.mxu0 0
        %1950 = vmatpush1.bf16.msra.mxu0 0
        %1951 = vmatprep.subr.bf16.mxu0 0
        %1952 = vmatpush1.bf16.msra.mxu0 0
        %1953 = vmatprep.subr.bf16.mxu0 0
        %1954 = vmatpush1.bf16.msra.mxu0 0
        %1955 = vmatprep.subr.bf16.mxu0 0
        %1956 = vmatpush1.bf16.msra.mxu0 0
        %1957 = vmatprep.subr.bf16.mxu0 0
        %1958 = vmatpush1.bf16.msra.mxu0 0
        %1959 = vmatprep.subr.bf16.mxu0 0
        %1960 = vmatpush1.bf16.msra.mxu0 0
        %1961 = vmatprep.subr.bf16.mxu0 0
        %1962 = vmatpush1.bf16.msra.mxu0 0
        %1963 = vmatprep.subr.bf16.mxu0 0
        %1964 = vmatpush1.bf16.msra.mxu0 0
        %1965 = vmatprep.subr.bf16.mxu0 0
        %1966 = vmatpush1.bf16.msra.mxu0 0
        %1967 = vmatprep.mubr.bf16.mxu0 0
        %1968 = vmatmul.mubr.bf16.gmra.mrb[0].mxu0 %v1933
        %v1969 = vpop.f32.mrb[0].mxu0
        %v1970 = vadd.f32 %v1918, %v1969
        %v1971 = vpop.f32.mrb[0].mxu0
        %v1972 = vpop.f32.mrb[0].mxu0
        %v1973 = vadd.f32 %v1918, %v1972
        %v1974 = vpop.f32.mrb[0].mxu0
        %1975 = vdwg.mxu0
        %v1976 = vmul.f32 %v1970, 1.702
        %v1977 = vmul.f32 %v1973, 1.702
        %v1978 = vxor.u32 %v1976, 2147483648
        %v1979 = vxor.u32 %v1977, 2147483648
        %v1980 = vmul.f32 %v1978, 1.442695
        %v1981 = vpow.pop %v1980
        %v1982 = vmul.f32 %v1979, 1.442695
        %v1983 = vpow.pop %v1982
        %v1984 = vadd.f32 %v1981, 1.0
        %v1985 = vadd.f32 %v1983, 1.0
        %v1986 = vrcp.pop %v1984
        %v1987 = vmul.f32 1.0, %v1986
        %v1988 = vrcp.pop %v1985
        %v1989 = vmul.f32 1.0, %v1988
        %v1990 = vmul.f32 %v1970, %v1987
        %v1991 = vmul.f32 %v1973, %v1989
        %v1992 = vpack.c.bf16 %v1991, %v1990
        %v1993 = vld [vmem:[%s634] sm:$0xf]
        %v1994 = vld [vmem:[%s634 + $0x4] sm:$0xf]
        %v1995 = vld [vmem:[%s634 + $0x8] sm:$0xf]
        %v1996 = vld [vmem:[%s634 + $0xc] sm:$0xf]
        %v1997 = vld [vmem:[%s634 + $0x10] sm:$0xf]
        %v1998 = vld [vmem:[%s634 + $0x14] sm:$0xf]
        %v1999 = vld [vmem:[%s634 + $0x18] sm:$0xf]
        %v2000 = vld [vmem:[%s634 + $0x1c] sm:$0xf]
        %v2001 = vld [vmem:[%s634 + $0x20] sm:$0xf]
        %v2002 = vld [vmem:[%s634 + $0x24] sm:$0xf]
        %v2003 = vld [vmem:[%s634 + $0x28] sm:$0xf]
        %v2004 = vld [vmem:[%s634 + $0x2c] sm:$0xf]
        %v2005 = vld [vmem:[%s634 + $0x30] sm:$0xf]
        %v2006 = vld [vmem:[%s634 + $0x34] sm:$0xf]
        %v2007 = vld [vmem:[%s634 + $0x38] sm:$0xf]
        %v2008 = vld [vmem:[%s634 + $0x3c] sm:$0xf]
        %v2009 = vld [vmem:[%s637] sm:$0x1]
        %v2011 = vlaneseq
        %v2012 = vshrl.u32 %v2011, 7
        %v2013 = vsub.s32 0, %v2012
        %v2014 = vrot.slane %v2009, %v2013
        %v2032 = vunpack.c.l.b16 %v1993
        %v2033 = vunpack.c.l.b16 %v1994
        %v2034 = vunpack.c.l.b16 %v1995
        %v2035 = vunpack.c.l.b16 %v1996
        %v2036 = vunpack.c.l.b16 %v1997
        %v2037 = vunpack.c.l.b16 %v1998
        %v2038 = vunpack.c.l.b16 %v1999
        %v2039 = vunpack.c.l.b16 %v2000
        %v2040 = vunpack.c.l.b16 %v2001
        %v2041 = vunpack.c.l.b16 %v2002
        %v2042 = vunpack.c.l.b16 %v2003
        %v2043 = vunpack.c.l.b16 %v2004
        %v2044 = vunpack.c.l.b16 %v2005
        %v2045 = vunpack.c.l.b16 %v2006
        %v2046 = vunpack.c.l.b16 %v2007
        %v2047 = vunpack.c.l.b16 %v2008
        %v2048 = vpack.c.b16 %v2033, %v2032
        %v2049 = vpack.c.b16 %v2035, %v2034
        %v2050 = vpack.c.b16 %v2037, %v2036
        %v2051 = vpack.c.b16 %v2039, %v2038
        %v2052 = vpack.c.b16 %v2041, %v2040
        %v2053 = vpack.c.b16 %v2043, %v2042
        %v2054 = vpack.c.b16 %v2045, %v2044
        %v2055 = vpack.c.b16 %v2047, %v2046
        %2064 = vmatprep.subr.bf16.mxu0 0
        %2065 = vmatpush1.bf16.msra.mxu0 %v2048
        %2066 = vmatprep.subr.bf16.mxu0 0
        %2067 = vmatpush1.bf16.msra.mxu0 %v2049
        %2068 = vmatprep.subr.bf16.mxu0 0
        %2069 = vmatpush1.bf16.msra.mxu0 %v2050
        %2070 = vmatprep.subr.bf16.mxu0 0
        %2071 = vmatpush1.bf16.msra.mxu0 %v2051
        %2072 = vmatprep.subr.bf16.mxu0 0
        %2073 = vmatpush1.bf16.msra.mxu0 %v2052
        %2074 = vmatprep.subr.bf16.mxu0 0
        %2075 = vmatpush1.bf16.msra.mxu0 %v2053
        %2076 = vmatprep.subr.bf16.mxu0 0
        %2077 = vmatpush1.bf16.msra.mxu0 %v2054
        %2078 = vmatprep.subr.bf16.mxu0 0
        %2079 = vmatpush1.bf16.msra.mxu0 %v2055
        %2080 = vmatprep.subr.bf16.mxu0 0
        %2081 = vmatpush1.bf16.msra.mxu0 0
        %2082 = vmatprep.subr.bf16.mxu0 0
        %2083 = vmatpush1.bf16.msra.mxu0 0
        %2084 = vmatprep.subr.bf16.mxu0 0
        %2085 = vmatpush1.bf16.msra.mxu0 0
        %2086 = vmatprep.subr.bf16.mxu0 0
        %2087 = vmatpush1.bf16.msra.mxu0 0
        %2088 = vmatprep.subr.bf16.mxu0 0
        %2089 = vmatpush1.bf16.msra.mxu0 0
        %2090 = vmatprep.subr.bf16.mxu0 0
        %2091 = vmatpush1.bf16.msra.mxu0 0
        %2092 = vmatprep.subr.bf16.mxu0 0
        %2093 = vmatpush1.bf16.msra.mxu0 0
        %2094 = vmatprep.subr.bf16.mxu0 0
        %2095 = vmatpush1.bf16.msra.mxu0 0
        %2096 = vmatprep.mubr.bf16.mxu0 0
        %2097 = vmatmul.mubr.bf16.gmra.mrb[0].mxu0 %v1992
        %v2098 = vpop.f32.mrb[0].mxu0
        %v2099 = vadd.f32 %v2014, %v2098
        %v2100 = vpop.f32.mrb[0].mxu0
        %v2101 = vpop.f32.mrb[0].mxu0
        %v2102 = vadd.f32 %v2014, %v2101
        %v2103 = vpop.f32.mrb[0].mxu0
        %2104 = vdwg.mxu0
        %v2105 = vadd.f32 %v1862, %v2099
        %v2106 = vadd.f32 %v1863, %v2102
        %2107 = vst.msk [vmem:[#allocation2] sm:$0xff] %vm653, %v2105
        %2108 = vst.msk [vmem:[#allocation2 + $0x8] sm:$0xff] %vm653, %v2106
        %p2109 = scmp.eq.s32.totalorder %s30, 1
        // Predicated region
        $region77: #{tpu_custom_call.1} parent=71 // pred_check
          %p2110 = pneg %p2109
        $region78: #{tpu_custom_call.1} parent=71 // pred_check_branch
          %2112 = sbr.rel (%p2110) target = $region80
        $region79: #{tpu_custom_call.1} parent=71 // pred_region
          %v2113 = vld [vmem:[#allocation2] sm:$0xff]
          %v2114 = vld [vmem:[#allocation2 + $0x8] sm:$0xff]
          %2115 = vst.msk [vmem:[#allocation3] sm:$0xff] %vm653, %v2113
          %2116 = vst.msk [vmem:[#allocation3 + $0x8] sm:$0xff] %vm653, %v2114
        $region80: #{tpu_custom_call.1} parent=71 // pred_fallthru
          _
        // Predicated region
        $region81: #{tpu_custom_call.1} parent=71 // pred_check
          %p2117 = pneg %p393
        $region82: #{tpu_custom_call.1} parent=71 // pred_check_branch
          %2119 = sbr.rel (%p2117) target = $region84
        $region83: #{tpu_custom_call.1} parent=71 // pred_region
          %s2120 = smul.u32 2, %s29
          %s2122 = ssub.s32 256, 256
          %2123 = vsyncadd [#allocation4], %s2122
          %s2124 = smul.addr %s2120, 128
          %s2125 = scalar_lea.hbm %s13, %s2124
          %s2126 = sshll.u32 [#allocation3], 4
          %s2127 = int_to_ptr.vmem [resolvable:$true] %s2126
          %2132 = dma.vmem_to_hbm [thread:$0]  %s2127, 256, %s2125, [#allocation4], 128, 128, 8
        $region84: #{tpu_custom_call.1} parent=71 // pred_fallthru
          _
        // Predicated region
        $region85: #{tpu_custom_call.1} parent=71 // pred_check
          %p2133 = pneg %p393
        $region86: #{tpu_custom_call.1} parent=71 // pred_check_branch
          %2135 = sbr.rel (%p2133) target = $region88
        $region87: #{tpu_custom_call.1} parent=71 // pred_region
          %2136 = dma.done [#allocation4], 256
        $region88: #{tpu_custom_call.1} parent=71 // pred_fallthru
          _
      $region72: #{tpu_custom_call.1} parent=5 // pred_fallthru
        _
      %p2137 = scmp.le.s32.totalorder 2, %s20
      // Predicated region
      $region89: #{tpu_custom_call.1} parent=5 // pred_check
        %p2138 = pneg %p2137
      $region90: #{tpu_custom_call.1} parent=5 // pred_check_branch
        %2140 = sbr.rel (%p2138) target = $region92
      $region91: #{tpu_custom_call.1} parent=5 // pred_region
        %s2141 = ssub.s32 %s20, 2
      $region92: #{tpu_custom_call.1} parent=5 // pred_fallthru
        _
    $region6: #{tpu_custom_call.1} parent=1 // loop_footer
      %s24 = sadd.s32 1, %s20
    $region7: #{tpu_custom_call.1} parent=1 // loop_footer_branch
      %19 = sbr.rel target = $region3
    $region8: #{tpu_custom_call.1} parent=1 // loop_exit
      _
    %2142 = vsyncpa [#allocation4], 1
    %s2143 = scalar_lea.sflag [#allocation4], 1
    %2144 = vsyncpa %s2143, 1

</llo_original>
